<compile_context>
chip_gen: v5e
topology: v5e:2x2
jax: 0.10.0
libtpu: 0.0.40
codegen_flags: <defaults>
</compile_context>

<pallas_src>
import jax
import jax.numpy as jnp
from jax import lax
from jax.experimental import pallas as pl
from jax.experimental.pallas import tpu as pltpu


# --------------------------------------------------------------------------- #
# Kernel
# --------------------------------------------------------------------------- #
def _fused_up_conv_kernel(x_ref, wf_ref, b_ref, o_ref):
    """One (image, row-strip) step of fused nearest-2x upsample + 3x3 SAME conv.

    x_ref : (1, Hp+2, W+2, Cin)   zero-pre-padded NHWC image, resident across
                                  the strip grid axis (constant index_map).
    wf_ref: (2, 2, 4*Cin, Cout)   parity-fused weights; wf_ref[p, q] row
                                  (2a+b)*Cin+ci multiplies x[m+p+a-1, n+q+b-1, ci].
    b_ref : (1, 2*Cout)           bias tiled over the column parity.
    o_ref : (1, 2*tHi, W, 2*Cout) output strip; element (2m+p, n, q*Cout+c)
                                  == NHWC output (2*(m0+m)+p, 2n+q, c).
    """
    tHi = o_ref.shape[1] // 2
    W = o_ref.shape[2]
    Cout = o_ref.shape[3] // 2

    r = pl.program_id(1)
    m0 = pl.multiple_of(r * tHi, tHi)     # first un-padded input row of strip

    dn = (((2,), (0,)), ((), ()))         # contract the folded tap/channel axis

    halves = []
    for p in range(2):                    # output row parity
        # Two halo'd row windows, full minor-dim extent (aligned loads, also
        # for packed bf16 inputs).  Upcast once: all in-register math is f32
        # (v5e has no bf16 VALU); the MXU accumulates in f32 regardless.
        rw = [x_ref[0, pl.ds(m0 + p + a, tHi), :, :].astype(jnp.float32)
              for a in range(2)]          # each (tHi, W+2, Cin)

        q_cats = []
        for q in range(2):                # output column parity
            # Fold the 2x2 fused taps into the contraction K: (tHi, W, 4*Cin).
            pieces = [rw[a][:, q + b:q + b + W, :]
                      for a in range(2) for b in range(2)]
            lhs = jnp.concatenate(pieces, axis=-1)
            q_cats.append(
                lax.dot_general(lhs, wf_ref[p, q], dimension_numbers=dn,
                                preferred_element_type=jnp.float32))
        # Column-parity interleave == channel-axis concat (row-major identical
        # to the (2W, Cout) output ordering).
        halves.append(jnp.concatenate(q_cats, axis=-1))      # (tHi, W, 2*Cout)

    # Row-parity interleave: merge over leading (un-tiled) dims -> free reshape.
    full = jnp.stack(halves, axis=1).reshape(2 * tHi, W, 2 * Cout)
    full = full + b_ref[0].astype(jnp.float32)[None, None, :]
    o_ref[0] = full.astype(o_ref.dtype)                       # full-block store


# --------------------------------------------------------------------------- #
# Weight fusion (wrapper side, runs once under jit)
# --------------------------------------------------------------------------- #
def _fuse_parity_weights(w_hwio):
    """(3,3,Cin,Cout) HWIO -> (2,2,4*Cin,Cout) sub-pixel fused weights.

    wf[p, q][(2a+b)*Cin + ci, co] multiplies x[m+p+a-1, n+q+b-1, ci] and
    contributes to output pixel (2m+p, 2n+q, co): exactly
    conv3x3(pad=1)(nearest_upsample_2x(x)).
    """
    w = w_hwio.astype(jnp.float32)
    Cin, Cout = int(w.shape[2]), int(w.shape[3])
    vert = [[w[0], w[1] + w[2]],       # p=0: input rows (m-1, m)
            [w[0] + w[1], w[2]]]       # p=1: input rows (m, m+1)
    rows_pq = []
    for p in range(2):
        cols_q = []
        for q in range(2):
            taps = []
            for a in range(2):
                wr = vert[p][a]                    # (3, Cin, Cout) over kw
                if q == 0:
                    taps.extend([wr[0], wr[1] + wr[2]])   # cols (n-1, n)
                else:
                    taps.extend([wr[0] + wr[1], wr[2]])   # cols (n, n+1)
            cols_q.append(jnp.stack(taps, axis=0).reshape(4 * Cin, Cout))
        rows_pq.append(jnp.stack(cols_q, axis=0))
    return jnp.stack(rows_pq, axis=0)              # (2, 2, 4*Cin, Cout) f32


# --------------------------------------------------------------------------- #
# VMEM budgeting / strip selection
# --------------------------------------------------------------------------- #
def _rup(x, m):
    return (x + m - 1) // m * m


def _blk_bytes(lead, sub, lane, itemsize):
    """Padded VMEM footprint of ONE buffer of a block with last dims (sub, lane)."""
    sub_tile = 8 * (4 // itemsize)                 # (8,128) f32 / (16,128) bf16
    return lead * _rup(sub, sub_tile) * _rup(lane, 128) * itemsize


def _vmem_need(tHi, H, W, Cin, Cout, in_e, out_e):
    R = -(-H // tHi)
    Hp = R * tHi
    need = 0
    need += 2 * _blk_bytes(Hp + 2, W + 2, Cin, in_e)     # resident image (x2 buf)
    need += 2 * _blk_bytes(4, 4 * Cin, Cout, 4)          # fused f32 weights (x2)
    need += 2 * _blk_bytes(1, 1, 2 * Cout, 4)            # bias (x2)
    need += 2 * _blk_bytes(2 * tHi, W, 2 * Cout, out_e)  # output strip (x2 buf)
    # transient f32 working set: row windows, folded-K LHS, parity results,
    # interleaved strip (vregs / spills)
    need += 4 * _blk_bytes(tHi, W + 2, Cin, 4)
    need += 4 * _blk_bytes(tHi, W, max(4 * Cin, 2 * Cout), 4)
    need += 2 * _blk_bytes(2 * tHi, W, 2 * Cout, 4)
    return need


def _tpu_vmem_capacity():
    try:
        return int(pltpu.get_tpu_info().vmem_capacity_bytes)
    except Exception:
        return 64 << 20                              # v7x-safe fallback


def _choose_strip_rows(H, W, Cin, Cout, in_e, out_e, budget):
    """Largest strip height (prefer whole image) whose working set fits."""
    if _vmem_need(H, H, W, Cin, Cout, in_e, out_e) <= budget:
        return H                                     # R == 1: one step per image
    best = 1
    for t in range(4, H, 4):                         # 2*t rows stay 8-aligned
        if _vmem_need(t, H, W, Cin, Cout, in_e, out_e) <= budget:
            best = t
    return best


# --------------------------------------------------------------------------- #
# Wrapper
# --------------------------------------------------------------------------- #
@jax.jit
def upsample_forward(x_nchw, w_hwio, bias):
    """nn.Upsample(2x, nearest) + Conv2d(Cin, Cout, 3, padding=1).

    x_nchw: (N, Cin, H, W) -> (N, Cout, 2H, 2W).  Output dtype follows x
    (f32 or bf16); the MXU always accumulates in f32.
    """
    N, Cin, H, W = x_nchw.shape
    Cout = int(w_hwio.shape[-1])
    dtype = x_nchw.dtype
    in_e = jnp.dtype(dtype).itemsize
    out_e = in_e

    cap = _tpu_vmem_capacity()
    budget = int(cap * 0.45)
    tHi = _choose_strip_rows(H, W, Cin, Cout, in_e, out_e, budget)
    R = pl.cdiv(H, tHi)
    Hp = R * tHi

    # NHWC + zero pre-pad: 1 col left/right, 1 row top, (Hp-H+1) rows bottom.
    # The kernel then reads halo'd windows straight from the ref (no in-kernel
    # concat / border masking) and non-dividing H costs a few padded rows
    # (sliced off below) instead of 1-row strips.
    x = jnp.transpose(x_nchw, (0, 2, 3, 1))
    x = jnp.pad(x, ((0, 0), (1, Hp - H + 1), (1, 1), (0, 0)))

    wf = _fuse_parity_weights(w_hwio)                       # (2,2,4*Cin,Cout) f32
    b2 = jnp.concatenate([bias, bias]).reshape(1, 2 * Cout).astype(jnp.float32)

    need = _vmem_need(tHi, H, W, Cin, Cout, in_e, out_e)
    vmem_limit = int(min(int(cap * 0.9), max(32 << 20, int(1.5 * need))))

    flops = 2 * 16 * N * H * W * Cin * Cout                 # minimal fused MACs
    bytes_accessed = (N * (Hp + 2) * (W + 2) * Cin * in_e
                      + N * 4 * Hp * W * Cout * out_e
                      + 16 * Cin * Cout * 4)

    out_slab = pl.pallas_call(
        _fused_up_conv_kernel,
        out_shape=jax.ShapeDtypeStruct((N, 2 * Hp, W, 2 * Cout), dtype),
        grid_spec=pltpu.PrefetchScalarGridSpec(
            num_scalar_prefetch=0,
            grid=(N, R),
            in_specs=[
                # whole pre-padded image, resident across the strip axis
                pl.BlockSpec((1, Hp + 2, W + 2, Cin), lambda n, r: (n, 0, 0, 0)),
                pl.BlockSpec((2, 2, 4 * Cin, Cout), lambda n, r: (0, 0, 0, 0)),
                pl.BlockSpec((1, 2 * Cout), lambda n, r: (0, 0)),
            ],
            out_specs=pl.BlockSpec((1, 2 * tHi, W, 2 * Cout),
                                   lambda n, r: (n, r, 0, 0)),
        ),
        compiler_params=pltpu.CompilerParams(
            dimension_semantics=("parallel", "parallel"),
            vmem_limit_bytes=vmem_limit),
        cost_estimate=pl.CostEstimate(flops=int(flops), transcendentals=0,
                                      bytes_accessed=int(bytes_accessed)),
    )(x, wf, b2)

    # (N, 2Hp, W, 2*Cout) is row-major identical to (N, 2Hp, 2W, Cout):
    # free merge of minor dims, then drop padded rows and go back to NCHW.
    out = out_slab.reshape(N, 2 * Hp, 2 * W, Cout)[:, :2 * H]
    return jnp.transpose(out, (0, 3, 1, 2))


# --------------------------------------------------------------------------- #
# Pure-JAX reference (XLA conv) for correctness checking
# --------------------------------------------------------------------------- #
def reference_forward(x_nchw, w_hwio, bias):
    x = jnp.transpose(x_nchw, (0, 2, 3, 1))
    x = jnp.repeat(jnp.repeat(x, 2, axis=1), 2, axis=2)
    y = lax.conv_general_dilated(
        x, w_hwio, window_strides=(1, 1), padding="SAME",
        dimension_numbers=("NHWC", "HWIO", "NHWC"))
    y = y + bias[None, None, None, :]
    return jnp.transpose(y, (0, 3, 1, 2))


if __name__ == "__main__":
    # Small shapes consistent with the module: batch=2, channels=4, spatial=16.
    N, C, H, W = 2, 4, 16, 16

    key = jax.random.PRNGKey(0)
    kx, kw, kb = jax.random.split(key, 3)

    x = jax.random.normal(kx, (N, C, H, W), dtype=jnp.float32)
    # PyTorch weight (Cout, Cin, 3, 3) -> HWIO.
    w_oihw = jax.random.normal(kw, (C, C, 3, 3), dtype=jnp.float32) * 0.1
    w_hwio = jnp.transpose(w_oihw, (2, 3, 1, 0))
    bias = jax.random.normal(kb, (C,), dtype=jnp.float32) * 0.1

    ref = reference_forward(x, w_hwio, bias)

    # f32 path: strict check.
    out = jax.block_until_ready(upsample_forward(x, w_hwio, bias))
    assert out.shape == (N, C, 2 * H, 2 * W), out.shape
    max_err = float(jnp.max(jnp.abs(out - ref)))
    assert jnp.allclose(out, ref, atol=2e-4, rtol=2e-4), max_err

    # bf16-I/O path (f32 accumulation): loose check (bf16 input/output rounding).
    out_bf = jax.block_until_ready(
        upsample_forward(x.astype(jnp.bfloat16), w_hwio, bias))
    assert out_bf.dtype == jnp.bfloat16
    max_err_bf = float(jnp.max(jnp.abs(out_bf.astype(jnp.float32) - ref)))
    assert max_err_bf < 1e-1, max_err_bf

    print("KERNEL_OK")
</pallas_src>

<mosaic_0001>
module attributes {stable_mosaic.version = 11 : i64} {
  func.func @_fused_up_conv_kernel(%arg0: i32, %arg1: i32, %arg2: memref<1x18x18x4xf32, #tpu.memory_space<vmem>>, %arg3: memref<2x2x16x4xf32, #tpu.memory_space<vmem>>, %arg4: memref<1x8xf32, #tpu.memory_space<vmem>>, %arg5: memref<1x32x16x8xf32, #tpu.memory_space<vmem>>) attributes {dimension_semantics = [#tpu.dimension_semantics<parallel>, #tpu.dimension_semantics<parallel>], iteration_bounds = array<i64: 2, 1>, scalar_prefetch = 0 : i64, scratch_operands = 0 : i64, tpu.core_type = #tpu.core_type<tc>, window_params = [{transform_indices = @transform_0, window_bounds = array<i64: 1, 18, 18, 4>}, {pipeline_mode = #tpu.pipeline_mode<synchronous>, transform_indices = @transform_1, window_bounds = array<i64: 2, 2, 16, 4>}, {pipeline_mode = #tpu.pipeline_mode<synchronous>, transform_indices = @transform_2, window_bounds = array<i64: 1, 8>}, {transform_indices = @transform_3, window_bounds = array<i64: 1, 32, 16, 8>}]} {
    %c16_i32 = arith.constant 16 : i32
    %0 = arith.muli %arg1, %c16_i32 : i32
    %1 = tpu.assume_multiple %0, 16 : i32
    %c0_i32 = arith.constant 0 : i32
    %2 = arith.addi %1, %c0_i32 : i32
    %c0_i32_0 = arith.constant 0 : i32
    %3 = arith.addi %2, %c0_i32_0 : i32
    %c0 = arith.constant 0 : index
    %4 = arith.index_cast %3 : i32 to index
    %c0_1 = arith.constant 0 : index
    %c0_2 = arith.constant 0 : index
    %5 = vector.load %arg2[%c0, %4, %c0_1, %c0_2] : memref<1x18x18x4xf32, #tpu.memory_space<vmem>>, vector<1x16x18x4xf32>
    %6 = vector.shape_cast %5 : vector<1x16x18x4xf32> to vector<16x18x4xf32>
    %c0_i32_3 = arith.constant 0 : i32
    %7 = arith.addi %1, %c0_i32_3 : i32
    %c1_i32 = arith.constant 1 : i32
    %8 = arith.addi %7, %c1_i32 : i32
    %c0_4 = arith.constant 0 : index
    %9 = arith.index_cast %8 : i32 to index
    %c0_5 = arith.constant 0 : index
    %c0_6 = arith.constant 0 : index
    %10 = vector.load %arg2[%c0_4, %9, %c0_5, %c0_6] : memref<1x18x18x4xf32, #tpu.memory_space<vmem>>, vector<1x16x18x4xf32>
    %11 = vector.shape_cast %10 : vector<1x16x18x4xf32> to vector<16x18x4xf32>
    %12 = vector.extract_strided_slice %6 {offsets = [0, 0, 0], sizes = [16, 16, 4], strides = [1, 1, 1]} : vector<16x18x4xf32> to vector<16x16x4xf32>
    %13 = vector.extract_strided_slice %6 {offsets = [0, 1, 0], sizes = [16, 16, 4], strides = [1, 1, 1]} : vector<16x18x4xf32> to vector<16x16x4xf32>
    %14 = vector.extract_strided_slice %11 {offsets = [0, 0, 0], sizes = [16, 16, 4], strides = [1, 1, 1]} : vector<16x18x4xf32> to vector<16x16x4xf32>
    %15 = vector.extract_strided_slice %11 {offsets = [0, 1, 0], sizes = [16, 16, 4], strides = [1, 1, 1]} : vector<16x18x4xf32> to vector<16x16x4xf32>
    %16 = tpu.concatenate %12, %13, %14, %15 in 2 : vector<16x16x4xf32>, vector<16x16x4xf32>, vector<16x16x4xf32>, vector<16x16x4xf32> -> vector<16x16x16xf32>
    %c0_7 = arith.constant 0 : index
    %c0_8 = arith.constant 0 : index
    %c0_9 = arith.constant 0 : index
    %c0_10 = arith.constant 0 : index
    %17 = vector.load %arg3[%c0_7, %c0_8, %c0_9, %c0_10] : memref<2x2x16x4xf32, #tpu.memory_space<vmem>>, vector<1x1x16x4xf32>
    %18 = vector.shape_cast %17 : vector<1x1x16x4xf32> to vector<16x4xf32>
    %cst = arith.constant dense<0.000000e+00> : vector<16x16x4xf32>
    %19 = tpu.matmul %16, %18, %cst {dimension_numbers = #tpu.dot_dimension_numbers<[2], [0], [0, 1], [1], [0, 0, 0, 1, 1, 1], [], []>} : vector<16x16x16xf32>, vector<16x4xf32>, vector<16x16x4xf32> -> vector<16x16x4xf32>
    %20 = vector.extract_strided_slice %6 {offsets = [0, 1, 0], sizes = [16, 16, 4], strides = [1, 1, 1]} : vector<16x18x4xf32> to vector<16x16x4xf32>
    %21 = vector.extract_strided_slice %6 {offsets = [0, 2, 0], sizes = [16, 16, 4], strides = [1, 1, 1]} : vector<16x18x4xf32> to vector<16x16x4xf32>
    %22 = vector.extract_strided_slice %11 {offsets = [0, 1, 0], sizes = [16, 16, 4], strides = [1, 1, 1]} : vector<16x18x4xf32> to vector<16x16x4xf32>
    %23 = vector.extract_strided_slice %11 {offsets = [0, 2, 0], sizes = [16, 16, 4], strides = [1, 1, 1]} : vector<16x18x4xf32> to vector<16x16x4xf32>
    %24 = tpu.concatenate %20, %21, %22, %23 in 2 : vector<16x16x4xf32>, vector<16x16x4xf32>, vector<16x16x4xf32>, vector<16x16x4xf32> -> vector<16x16x16xf32>
    %c0_11 = arith.constant 0 : index
    %c1 = arith.constant 1 : index
    %c0_12 = arith.constant 0 : index
    %c0_13 = arith.constant 0 : index
    %25 = vector.load %arg3[%c0_11, %c1, %c0_12, %c0_13] : memref<2x2x16x4xf32, #tpu.memory_space<vmem>>, vector<1x1x16x4xf32>
    %26 = vector.shape_cast %25 : vector<1x1x16x4xf32> to vector<16x4xf32>
    %cst_14 = arith.constant dense<0.000000e+00> : vector<16x16x4xf32>
    %27 = tpu.matmul %24, %26, %cst_14 {dimension_numbers = #tpu.dot_dimension_numbers<[2], [0], [0, 1], [1], [0, 0, 0, 1, 1, 1], [], []>} : vector<16x16x16xf32>, vector<16x4xf32>, vector<16x16x4xf32> -> vector<16x16x4xf32>
    %28 = tpu.concatenate %19, %27 in 2 : vector<16x16x4xf32>, vector<16x16x4xf32> -> vector<16x16x8xf32>
    %c1_i32_15 = arith.constant 1 : i32
    %29 = arith.addi %1, %c1_i32_15 : i32
    %c0_i32_16 = arith.constant 0 : i32
    %30 = arith.addi %29, %c0_i32_16 : i32
    %c0_17 = arith.constant 0 : index
    %31 = arith.index_cast %30 : i32 to index
    %c0_18 = arith.constant 0 : index
    %c0_19 = arith.constant 0 : index
    %32 = vector.load %arg2[%c0_17, %31, %c0_18, %c0_19] : memref<1x18x18x4xf32, #tpu.memory_space<vmem>>, vector<1x16x18x4xf32>
    %33 = vector.shape_cast %32 : vector<1x16x18x4xf32> to vector<16x18x4xf32>
    %c1_i32_20 = arith.constant 1 : i32
    %34 = arith.addi %1, %c1_i32_20 : i32
    %c1_i32_21 = arith.constant 1 : i32
    %35 = arith.addi %34, %c1_i32_21 : i32
    %c0_22 = arith.constant 0 : index
    %36 = arith.index_cast %35 : i32 to index
    %c0_23 = arith.constant 0 : index
    %c0_24 = arith.constant 0 : index
    %37 = vector.load %arg2[%c0_22, %36, %c0_23, %c0_24] : memref<1x18x18x4xf32, #tpu.memory_space<vmem>>, vector<1x16x18x4xf32>
    %38 = vector.shape_cast %37 : vector<1x16x18x4xf32> to vector<16x18x4xf32>
    %39 = vector.extract_strided_slice %33 {offsets = [0, 0, 0], sizes = [16, 16, 4], strides = [1, 1, 1]} : vector<16x18x4xf32> to vector<16x16x4xf32>
    %40 = vector.extract_strided_slice %33 {offsets = [0, 1, 0], sizes = [16, 16, 4], strides = [1, 1, 1]} : vector<16x18x4xf32> to vector<16x16x4xf32>
    %41 = vector.extract_strided_slice %38 {offsets = [0, 0, 0], sizes = [16, 16, 4], strides = [1, 1, 1]} : vector<16x18x4xf32> to vector<16x16x4xf32>
    %42 = vector.extract_strided_slice %38 {offsets = [0, 1, 0], sizes = [16, 16, 4], strides = [1, 1, 1]} : vector<16x18x4xf32> to vector<16x16x4xf32>
    %43 = tpu.concatenate %39, %40, %41, %42 in 2 : vector<16x16x4xf32>, vector<16x16x4xf32>, vector<16x16x4xf32>, vector<16x16x4xf32> -> vector<16x16x16xf32>
    %c1_25 = arith.constant 1 : index
    %c0_26 = arith.constant 0 : index
    %c0_27 = arith.constant 0 : index
    %c0_28 = arith.constant 0 : index
    %44 = vector.load %arg3[%c1_25, %c0_26, %c0_27, %c0_28] : memref<2x2x16x4xf32, #tpu.memory_space<vmem>>, vector<1x1x16x4xf32>
    %45 = vector.shape_cast %44 : vector<1x1x16x4xf32> to vector<16x4xf32>
    %cst_29 = arith.constant dense<0.000000e+00> : vector<16x16x4xf32>
    %46 = tpu.matmul %43, %45, %cst_29 {dimension_numbers = #tpu.dot_dimension_numbers<[2], [0], [0, 1], [1], [0, 0, 0, 1, 1, 1], [], []>} : vector<16x16x16xf32>, vector<16x4xf32>, vector<16x16x4xf32> -> vector<16x16x4xf32>
    %47 = vector.extract_strided_slice %33 {offsets = [0, 1, 0], sizes = [16, 16, 4], strides = [1, 1, 1]} : vector<16x18x4xf32> to vector<16x16x4xf32>
    %48 = vector.extract_strided_slice %33 {offsets = [0, 2, 0], sizes = [16, 16, 4], strides = [1, 1, 1]} : vector<16x18x4xf32> to vector<16x16x4xf32>
    %49 = vector.extract_strided_slice %38 {offsets = [0, 1, 0], sizes = [16, 16, 4], strides = [1, 1, 1]} : vector<16x18x4xf32> to vector<16x16x4xf32>
    %50 = vector.extract_strided_slice %38 {offsets = [0, 2, 0], sizes = [16, 16, 4], strides = [1, 1, 1]} : vector<16x18x4xf32> to vector<16x16x4xf32>
    %51 = tpu.concatenate %47, %48, %49, %50 in 2 : vector<16x16x4xf32>, vector<16x16x4xf32>, vector<16x16x4xf32>, vector<16x16x4xf32> -> vector<16x16x16xf32>
    %c1_30 = arith.constant 1 : index
    %c1_31 = arith.constant 1 : index
    %c0_32 = arith.constant 0 : index
    %c0_33 = arith.constant 0 : index
    %52 = vector.load %arg3[%c1_30, %c1_31, %c0_32, %c0_33] : memref<2x2x16x4xf32, #tpu.memory_space<vmem>>, vector<1x1x16x4xf32>
    %53 = vector.shape_cast %52 : vector<1x1x16x4xf32> to vector<16x4xf32>
    %cst_34 = arith.constant dense<0.000000e+00> : vector<16x16x4xf32>
    %54 = tpu.matmul %51, %53, %cst_34 {dimension_numbers = #tpu.dot_dimension_numbers<[2], [0], [0, 1], [1], [0, 0, 0, 1, 1, 1], [], []>} : vector<16x16x16xf32>, vector<16x4xf32>, vector<16x16x4xf32> -> vector<16x16x4xf32>
    %55 = tpu.concatenate %46, %54 in 2 : vector<16x16x4xf32>, vector<16x16x4xf32> -> vector<16x16x8xf32>
    %56 = vector.shape_cast %28 : vector<16x16x8xf32> to vector<16x1x16x8xf32>
    %57 = vector.shape_cast %55 : vector<16x16x8xf32> to vector<16x1x16x8xf32>
    %58 = tpu.concatenate %56, %57 in 1 : vector<16x1x16x8xf32>, vector<16x1x16x8xf32> -> vector<16x2x16x8xf32>
    %59 = vector.shape_cast %58 : vector<16x2x16x8xf32> to vector<32x16x8xf32>
    %c0_35 = arith.constant 0 : index
    %c0_36 = arith.constant 0 : index
    %60 = vector.load %arg4[%c0_35, %c0_36] : memref<1x8xf32, #tpu.memory_space<vmem>>, vector<1x8xf32>
    %61 = vector.shape_cast %60 : vector<1x8xf32> to vector<8xf32>
    %62 = vector.shape_cast %61 : vector<8xf32> to vector<1x1x8xf32>
    %63 = vector.broadcast %62 : vector<1x1x8xf32> to vector<32x16x8xf32>
    %64 = arith.addf %59, %63 : vector<32x16x8xf32>
    %c0_37 = arith.constant 0 : index
    %c0_38 = arith.constant 0 : index
    %c0_39 = arith.constant 0 : index
    %c0_40 = arith.constant 0 : index
    %65 = vector.load %arg5[%c0_37, %c0_38, %c0_39, %c0_40] : memref<1x32x16x8xf32, #tpu.memory_space<vmem>>, vector<1x32x16x8xf32>
    %66 = vector.shape_cast %65 : vector<1x32x16x8xf32> to vector<32x16x8xf32>
    %67 = vector.shape_cast %64 : vector<32x16x8xf32> to vector<1x32x16x8xf32>
    tpu.vector_store %arg5[%c0_37, %c0_38, %c0_39, %c0_40], %67 {strides = array<i32>} : memref<1x32x16x8xf32, #tpu.memory_space<vmem>>, vector<1x32x16x8xf32>,
    return
  }
  func.func @transform_0(%arg0: i32, %arg1: i32) -> (i32, i32, i32, i32) {
    %c0_i32 = arith.constant 0 : i32
    %c0_i32_0 = arith.constant 0 : i32
    %c0_i32_1 = arith.constant 0 : i32
    %c0_i32_2 = arith.constant 0 : i32
    return %arg0, %c0_i32, %c0_i32_0, %c0_i32_1 : i32, i32, i32, i32
  }
  func.func @transform_1(%arg0: i32, %arg1: i32) -> (i32, i32, i32, i32) {
    %c0_i32 = arith.constant 0 : i32
    %c0_i32_0 = arith.constant 0 : i32
    %c0_i32_1 = arith.constant 0 : i32
    %c0_i32_2 = arith.constant 0 : i32
    %c0_i32_3 = arith.constant 0 : i32
    return %c0_i32, %c0_i32_0, %c0_i32_1, %c0_i32_2 : i32, i32, i32, i32
  }
  func.func @transform_2(%arg0: i32, %arg1: i32) -> (i32, i32) {
    %c0_i32 = arith.constant 0 : i32
    %c0_i32_0 = arith.constant 0 : i32
    %c0_i32_1 = arith.constant 0 : i32
    return %c0_i32, %c0_i32_0 : i32, i32
  }
  func.func @transform_3(%arg0: i32, %arg1: i32) -> (i32, i32, i32, i32) {
    %c0_i32 = arith.constant 0 : i32
    %c0_i32_0 = arith.constant 0 : i32
    %c0_i32_1 = arith.constant 0 : i32
    return %arg0, %arg1, %c0_i32, %c0_i32_0 : i32, i32, i32, i32
  }
}

</mosaic_0001>

<llo_original>
// kernel: upsample_forward.1
$region0: #{upsample_forward.1}
  #allocation0 [shape = 'u32[]', space=smem, size = 0x4, offset = 0x4, fixed_abs, tag = 'smem constant byte address 0x4 - core index']
  #allocation1 [shape = 'u32[72,128]{1,0:T(1,128)}', space=vmem, size = 0x9000, scoped, tag = 'internal scratch']
  %s0 = inlined_call_operand.vmem [shape: f32[2,18,18,4], index: 0, kind: input, shape index: {}]
  %s1 = inlined_call_operand.vmem [shape: f32[2,2,16,4], index: 1, kind: input, shape index: {}]
  %s2 = inlined_call_operand.vmem [shape: f32[1,8], index: 2, kind: input, shape index: {}]
  %s3 = inlined_call_operand.vmem [shape: f32[2,32,16,8], index: 3, kind: output, shape index: {}]
  %s4 = sld [smem:[#allocation0]]
  $region45: #{upsample_forward.1} parent=0
    _
  %s6 = ssub.s32 1, %s4
  %s7 = scalar_select 0, %s6, %s4
  loop: start=0, step=1, limit=4
  $region2: #{upsample_forward.1} parent=0 // loop_pre_header
    _
  $region3: #{upsample_forward.1} parent=0 // loop_header
    %s9 = sphi 0, %s13
    %p10 = scmp.ge.s32.totalorder %s9, 4
    %s16 = sphi 0, %s28
    %s17 = sphi 0, %s24
    %s18 = sphi 0, %s16
    %s19 = sphi 0, %s17
    %s20 = sphi 0, %s18
    %s21 = sphi 0, %s19
    %s31 = sphi 0, %s33
    %s34 = sphi 0, %s31
    %s35 = sphi 0, %s34
    %s51 = sphi 0, %s35
    %s55 = sphi 0, %s55
    %s57 = sphi 0, %s55
    %s58 = sphi 0, %s57
    %s72 = sphi 0, %s58
    %s76 = sphi 0, %s76
    %s78 = sphi 0, %s76
    %s79 = sphi 0, %s78
    %s93 = sphi 0, %s79
    %s101 = sphi 0, %s103
    %s104 = sphi 0, %s101
    %s105 = sphi 0, %s104
    %s121 = sphi 0, %s105
  $region4: #{upsample_forward.1} parent=0 // loop_header_branch
    %12 = sbr.rel (%p10) target = $region8
  $region5: #{upsample_forward.1} parent=0 // loop_body
    %s14 = ssub.s32 %s9, 1
    %s15 = ssub.s32 %s9, 2
    %s22 = sadd.s32 1, %s17
    %p23 = scmp.ge.s32.totalorder %s22, 1
    %s24 = scalar_select %p23, 0, %s22
    %s25 = sadd.s32 1, %s16
    %s26 = scalar_select %p23, %s25, %s16
    %p27 = scmp.ge.s32.totalorder %s26, 2
    %s28 = scalar_select %p27, 0, %s26
    %s29 = ssub.s32 %s16, %s28
    %p30 = scmp.eq.s32.totalorder %s29, 0
    %s32 = sadd.s32 %s31, 1
    %s33 = scalar_select %p30, %s31, %s32
    %p36 = pneg %p30
    %p37 = scmp.eq.s32.totalorder %s9, 1
    %p38 = por %p36, %p37
    %p39 = scmp.ne.s32.totalorder %s31, %s34
    %p40 = scmp.eq.s32.totalorder %s9, 0
    %p41 = por %p39, %p40
    %p42 = scmp.ne.s32.totalorder %s31, %s34
    %p43 = scmp.eq.s32.totalorder %s14, 1
    %p44 = por %p42, %p43
    %p45 = scmp.ne.s32.totalorder %s34, %s35
    %p46 = scmp.eq.s32.totalorder %s14, 0
    %p47 = por %p45, %p46
    %p48 = scmp.ne.s32.totalorder %s34, %s35
    %p49 = scmp.eq.s32.totalorder %s15, 1
    %p50 = por %p48, %p49
    %p52 = scmp.ne.s32.totalorder %s35, %s51
    %p53 = scmp.eq.s32.totalorder %s15, 0
    %p54 = por %p52, %p53
    %s56 = sadd.s32 %s55, 1
    %p59 = scmp.eq.s32.totalorder %s9, 1
    %p60 = scmp.ne.s32.totalorder %s55, %s57
    %p61 = scmp.eq.s32.totalorder %s9, 0
    %p62 = por %p60, %p61
    %p63 = scmp.ne.s32.totalorder %s55, %s57
    %p64 = scmp.eq.s32.totalorder %s14, 1
    %p65 = por %p63, %p64
    %p66 = scmp.ne.s32.totalorder %s57, %s58
    %p67 = scmp.eq.s32.totalorder %s14, 0
    %p68 = por %p66, %p67
    %p69 = scmp.ne.s32.totalorder %s57, %s58
    %p70 = scmp.eq.s32.totalorder %s15, 1
    %p71 = por %p69, %p70
    %p73 = scmp.ne.s32.totalorder %s58, %s72
    %p74 = scmp.eq.s32.totalorder %s15, 0
    %p75 = por %p73, %p74
    %s77 = sadd.s32 %s76, 1
    %p80 = scmp.eq.s32.totalorder %s9, 1
    %p81 = scmp.ne.s32.totalorder %s76, %s78
    %p82 = scmp.eq.s32.totalorder %s9, 0
    %p83 = por %p81, %p82
    %p84 = scmp.ne.s32.totalorder %s76, %s78
    %p85 = scmp.eq.s32.totalorder %s14, 1
    %p86 = por %p84, %p85
    %p87 = scmp.ne.s32.totalorder %s78, %s79
    %p88 = scmp.eq.s32.totalorder %s14, 0
    %p89 = por %p87, %p88
    %p90 = scmp.ne.s32.totalorder %s78, %s79
    %p91 = scmp.eq.s32.totalorder %s15, 1
    %p92 = por %p90, %p91
    %p94 = scmp.ne.s32.totalorder %s79, %s93
    %p95 = scmp.eq.s32.totalorder %s15, 0
    %p96 = por %p94, %p95
    %s97 = ssub.s32 %s16, %s28
    %s98 = ssub.s32 %s17, %s24
    %s99 = sor.u32 %s97, %s98
    %p100 = scmp.eq.s32.totalorder %s99, 0
    %s102 = sadd.s32 %s101, 1
    %s103 = scalar_select %p100, %s101, %s102
    %p106 = pneg %p100
    %p107 = scmp.eq.s32.totalorder %s9, 1
    %p108 = por %p106, %p107
    %p109 = scmp.ne.s32.totalorder %s101, %s104
    %p110 = scmp.eq.s32.totalorder %s9, 0
    %p111 = por %p109, %p110
    %p112 = scmp.ne.s32.totalorder %s101, %s104
    %p113 = scmp.eq.s32.totalorder %s14, 1
    %p114 = por %p112, %p113
    %p115 = scmp.ne.s32.totalorder %s104, %s105
    %p116 = scmp.eq.s32.totalorder %s14, 0
    %p117 = por %p115, %p116
    %p118 = scmp.ne.s32.totalorder %s104, %s105
    %p119 = scmp.eq.s32.totalorder %s15, 1
    %p120 = por %p118, %p119
    %p122 = scmp.ne.s32.totalorder %s105, %s121
    %p123 = scmp.eq.s32.totalorder %s15, 0
    %p124 = por %p122, %p123
    %p125 = scmp.le.s32.totalorder 1, %s9
    %p126 = scmp.lt.s32.totalorder %s9, 3
    %p127 = pnand %p125, %p126
    %p128 = pneg %p127
    // Predicated region
    $region9: #{upsample_forward.1} parent=5 // pred_check
      _
    $region10: #{upsample_forward.1} parent=5 // pred_check_branch
      %130 = sbr.rel (%p127) target = $region12
    $region11: #{upsample_forward.1} parent=5 // pred_region
      %s131 = ssub.s32 %s9, 1
      // Predicated region
      $region13: #{upsample_forward.1} parent=11 // pred_check
        %p132 = pneg %p68
      $region14: #{upsample_forward.1} parent=11 // pred_check_branch
        %134 = sbr.rel (%p132) target = $region16
      $region15: #{upsample_forward.1} parent=11 // pred_region
        _
      $region16: #{upsample_forward.1} parent=11 // pred_fallthru
        _
      // Predicated region
      $region17: #{upsample_forward.1} parent=11 // pred_check
        %p135 = pneg %p89
      $region18: #{upsample_forward.1} parent=11 // pred_check_branch
        %137 = sbr.rel (%p135) target = $region20
      $region19: #{upsample_forward.1} parent=11 // pred_region
        _
      $region20: #{upsample_forward.1} parent=11 // pred_fallthru
        _
    $region12: #{upsample_forward.1} parent=5 // pred_fallthru
      _
    %p138 = scmp.lt.s32.totalorder %s9, 2
    // Predicated region
    $region21: #{upsample_forward.1} parent=5 // pred_check
      %p139 = pneg %p138
    $region22: #{upsample_forward.1} parent=5 // pred_check_branch
      %141 = sbr.rel (%p139) target = $region24
    $region23: #{upsample_forward.1} parent=5 // pred_region
      // Predicated region
      $region25: #{upsample_forward.1} parent=23 // pred_check
        %p142 = pneg %p41
      $region26: #{upsample_forward.1} parent=23 // pred_check_branch
        %144 = sbr.rel (%p142) target = $region28
      $region27: #{upsample_forward.1} parent=23 // pred_region
        %p145 = scmp.lt.s32.totalorder %s16, 1
        %s146 = scalar_select %p145, %s16, 1
        %s147 = smul.addr %s146, 54
        %s148 = smul.addr %s147, 8
        %s149 = scalar_lea.vmem %s0, %s148
      $region28: #{upsample_forward.1} parent=23 // pred_fallthru
        _
    $region24: #{upsample_forward.1} parent=5 // pred_fallthru
      _
    %p150 = scmp.le.s32.totalorder 1, %s9
    %p151 = scmp.lt.s32.totalorder %s9, 3
    %p152 = pnand %p150, %p151
    %p153 = pneg %p152
    // Predicated region
    $region29: #{upsample_forward.1} parent=5 // pred_check
      _
    $region30: #{upsample_forward.1} parent=5 // pred_check_branch
      %155 = sbr.rel (%p152) target = $region32
    $region31: #{upsample_forward.1} parent=5 // pred_region
      %s156 = ssub.s32 %s9, 1
      %p157 = scmp.lt.s32.totalorder %s18, 1
      %s158 = scalar_select %p157, %s18, 1
      %s159 = smul.addr %s158, 54
      %s160 = smul.addr %s159, 8
      %s161 = scalar_lea.vmem %s0, %s160
      %p162 = pneg %p47
      %p163 = pneg %p44
      %p164 = pneg %p68
      %p165 = pneg %p65
      %p166 = pneg %p89
      %p167 = pneg %p86
      %p168 = pneg %p117
      %p169 = pneg %p114
      %s170 = smul.u32 32, %s19
      %p171 = scmp.lt.s32.totalorder %s18, 1
      %s172 = scalar_select %p171, %s18, 1
      %p173 = scmp.lt.s32.totalorder %s170, 31
      %s174 = scalar_select %p173, %s170, 31
      %s175 = smul.addr %s174, 2
      %s176 = smul.addr %s172, 64
      %s177 = sadd.s32 %s175, %s176
      %s178 = smul.addr %s177, 8
      %s179 = scalar_lea.vmem %s3, %s178
      %p180 = scmp.lt.s32.totalorder %s18, 1
      %s181 = scalar_select %p180, %s18, 1
      %s182 = smul.addr %s181, 54
      %s183 = smul.addr %s182, 8
      %s184 = scalar_lea.vmem %s0, %s183
      %s185 = smul.u32 32, %s19
      %p186 = scmp.lt.s32.totalorder %s18, 1
      %s187 = scalar_select %p186, %s18, 1
      %p188 = scmp.lt.s32.totalorder %s185, 31
      %s189 = scalar_select %p188, %s185, 31
      %s190 = smul.addr %s189, 2
      %s191 = smul.addr %s187, 64
      %s192 = sadd.s32 %s190, %s191
      %s193 = smul.addr %s192, 8
      %s194 = scalar_lea.vmem %s3, %s193
      %s195 = smul.u32 32, %s19
      %s196 = smul.u32 %s19, 16
      %s197 = smul.u32 %s196, 24
      %s198 = scalar_lea.vmem %s184, %s197
      %v199 = vld [vmem:[%s198] sm:$0xff]
      %v200 = vld [vmem:[%s198 + $0x8] sm:$0xff]
      %v201 = vld [vmem:[%s198 + $0x10] sm:$0x3]
      %v202 = vld [vmem:[%s198 + $0x18] sm:$0xff]
      %v203 = vld [vmem:[%s198 + $0x20] sm:$0xff]
      %v204 = vld [vmem:[%s198 + $0x28] sm:$0x3]
      %v205 = vld [vmem:[%s198 + $0x30] sm:$0xff]
      %v206 = vld [vmem:[%s198 + $0x38] sm:$0xff]
      %v207 = vld [vmem:[%s198 + $0x40] sm:$0x3]
      %v208 = vld [vmem:[%s198 + $0x48] sm:$0xff]
      %v209 = vld [vmem:[%s198 + $0x50] sm:$0xff]
      %v210 = vld [vmem:[%s198 + $0x58] sm:$0x3]
      %v211 = vld [vmem:[%s198 + $0x60] sm:$0xff]
      %v212 = vld [vmem:[%s198 + $0x68] sm:$0xff]
      %v213 = vld [vmem:[%s198 + $0x70] sm:$0x3]
      %v214 = vld [vmem:[%s198 + $0x78] sm:$0xff]
      %v215 = vld [vmem:[%s198 + $0x80] sm:$0xff]
      %v216 = vld [vmem:[%s198 + $0x88] sm:$0x3]
      %v217 = vld [vmem:[%s198 + $0x90] sm:$0xff]
      %v218 = vld [vmem:[%s198 + $0x98] sm:$0xff]
      %v219 = vld [vmem:[%s198 + $0xa0] sm:$0x3]
      %v220 = vld [vmem:[%s198 + $0xa8] sm:$0xff]
      %v221 = vld [vmem:[%s198 + $0xb0] sm:$0xff]
      %v222 = vld [vmem:[%s198 + $0xb8] sm:$0x3]
      %v223 = vld [vmem:[%s198 + $0xc0] sm:$0xff]
      %v224 = vld [vmem:[%s198 + $0xc8] sm:$0xff]
      %v225 = vld [vmem:[%s198 + $0xd0] sm:$0x3]
      %v226 = vld [vmem:[%s198 + $0xd8] sm:$0xff]
      %v227 = vld [vmem:[%s198 + $0xe0] sm:$0xff]
      %v228 = vld [vmem:[%s198 + $0xe8] sm:$0x3]
      %v229 = vld [vmem:[%s198 + $0xf0] sm:$0xff]
      %v230 = vld [vmem:[%s198 + $0xf8] sm:$0xff]
      %v231 = vld [vmem:[%s198 + $0x100] sm:$0x3]
      %v232 = vld [vmem:[%s198 + $0x108] sm:$0xff]
      %v233 = vld [vmem:[%s198 + $0x110] sm:$0xff]
      %v234 = vld [vmem:[%s198 + $0x118] sm:$0x3]
      %v235 = vld [vmem:[%s198 + $0x120] sm:$0xff]
      %v236 = vld [vmem:[%s198 + $0x128] sm:$0xff]
      %v237 = vld [vmem:[%s198 + $0x130] sm:$0x3]
      %v238 = vld [vmem:[%s198 + $0x138] sm:$0xff]
      %v239 = vld [vmem:[%s198 + $0x140] sm:$0xff]
      %v240 = vld [vmem:[%s198 + $0x148] sm:$0x3]
      %v241 = vld [vmem:[%s198 + $0x150] sm:$0xff]
      %v242 = vld [vmem:[%s198 + $0x158] sm:$0xff]
      %v243 = vld [vmem:[%s198 + $0x160] sm:$0x3]
      %v244 = vld [vmem:[%s198 + $0x168] sm:$0xff]
      %v245 = vld [vmem:[%s198 + $0x170] sm:$0xff]
      %v246 = vld [vmem:[%s198 + $0x178] sm:$0x3]
      %s247 = sadd.s32 %s196, 1
      %s248 = smul.u32 %s247, 24
      %s249 = scalar_lea.vmem %s184, %s248
      %v250 = vld [vmem:[%s249] sm:$0xff]
      %v251 = vld [vmem:[%s249 + $0x8] sm:$0xff]
      %v252 = vld [vmem:[%s249 + $0x10] sm:$0x3]
      %v253 = vld [vmem:[%s249 + $0x18] sm:$0xff]
      %v254 = vld [vmem:[%s249 + $0x20] sm:$0xff]
      %v255 = vld [vmem:[%s249 + $0x28] sm:$0x3]
      %v256 = vld [vmem:[%s249 + $0x30] sm:$0xff]
      %v257 = vld [vmem:[%s249 + $0x38] sm:$0xff]
      %v258 = vld [vmem:[%s249 + $0x40] sm:$0x3]
      %v259 = vld [vmem:[%s249 + $0x48] sm:$0xff]
      %v260 = vld [vmem:[%s249 + $0x50] sm:$0xff]
      %v261 = vld [vmem:[%s249 + $0x58] sm:$0x3]
      %v262 = vld [vmem:[%s249 + $0x60] sm:$0xff]
      %v263 = vld [vmem:[%s249 + $0x68] sm:$0xff]
      %v264 = vld [vmem:[%s249 + $0x70] sm:$0x3]
      %v265 = vld [vmem:[%s249 + $0x78] sm:$0xff]
      %v266 = vld [vmem:[%s249 + $0x80] sm:$0xff]
      %v267 = vld [vmem:[%s249 + $0x88] sm:$0x3]
      %v268 = vld [vmem:[%s249 + $0x90] sm:$0xff]
      %v269 = vld [vmem:[%s249 + $0x98] sm:$0xff]
      %v270 = vld [vmem:[%s249 + $0xa0] sm:$0x3]
      %v271 = vld [vmem:[%s249 + $0xa8] sm:$0xff]
      %v272 = vld [vmem:[%s249 + $0xb0] sm:$0xff]
      %v273 = vld [vmem:[%s249 + $0xb8] sm:$0x3]
      %v274 = vld [vmem:[%s249 + $0xc0] sm:$0xff]
      %v275 = vld [vmem:[%s249 + $0xc8] sm:$0xff]
      %v276 = vld [vmem:[%s249 + $0xd0] sm:$0x3]
      %v277 = vld [vmem:[%s249 + $0xd8] sm:$0xff]
      %v278 = vld [vmem:[%s249 + $0xe0] sm:$0xff]
      %v279 = vld [vmem:[%s249 + $0xe8] sm:$0x3]
      %v280 = vld [vmem:[%s249 + $0xf0] sm:$0xff]
      %v281 = vld [vmem:[%s249 + $0xf8] sm:$0xff]
      %v282 = vld [vmem:[%s249 + $0x100] sm:$0x3]
      %v283 = vld [vmem:[%s249 + $0x108] sm:$0xff]
      %v284 = vld [vmem:[%s249 + $0x110] sm:$0xff]
      %v285 = vld [vmem:[%s249 + $0x118] sm:$0x3]
      %v286 = vld [vmem:[%s249 + $0x120] sm:$0xff]
      %v287 = vld [vmem:[%s249 + $0x128] sm:$0xff]
      %v288 = vld [vmem:[%s249 + $0x130] sm:$0x3]
      %v289 = vld [vmem:[%s249 + $0x138] sm:$0xff]
      %v290 = vld [vmem:[%s249 + $0x140] sm:$0xff]
      %v291 = vld [vmem:[%s249 + $0x148] sm:$0x3]
      %v292 = vld [vmem:[%s249 + $0x150] sm:$0xff]
      %v293 = vld [vmem:[%s249 + $0x158] sm:$0xff]
      %v294 = vld [vmem:[%s249 + $0x160] sm:$0x3]
      %v295 = vld [vmem:[%s249 + $0x168] sm:$0xff]
      %v296 = vld [vmem:[%s249 + $0x170] sm:$0xff]
      %v297 = vld [vmem:[%s249 + $0x178] sm:$0x3]
      %vm346 = vcmask 1046528
      %v347 = vrot.slane %v199, 1
      %v348 = vrot.slane %v200, 1
      %v349 = vsel %vm346, %v347, %v348
      %v350 = vrot.slane %v201, 1
      %v351 = vsel %vm346, %v348, %v350
      %v352 = vrot.slane %v202, 1
      %v353 = vrot.slane %v203, 1
      %v354 = vsel %vm346, %v352, %v353
      %v355 = vrot.slane %v204, 1
      %v356 = vsel %vm346, %v353, %v355
      %v357 = vrot.slane %v205, 1
      %v358 = vrot.slane %v206, 1
      %v359 = vsel %vm346, %v357, %v358
      %v360 = vrot.slane %v207, 1
      %v361 = vsel %vm346, %v358, %v360
      %v362 = vrot.slane %v208, 1
      %v363 = vrot.slane %v209, 1
      %v364 = vsel %vm346, %v362, %v363
      %v365 = vrot.slane %v210, 1
      %v366 = vsel %vm346, %v363, %v365
      %v367 = vrot.slane %v211, 1
      %v368 = vrot.slane %v212, 1
      %v369 = vsel %vm346, %v367, %v368
      %v370 = vrot.slane %v213, 1
      %v371 = vsel %vm346, %v368, %v370
      %v372 = vrot.slane %v214, 1
      %v373 = vrot.slane %v215, 1
      %v374 = vsel %vm346, %v372, %v373
      %v375 = vrot.slane %v216, 1
      %v376 = vsel %vm346, %v373, %v375
      %v377 = vrot.slane %v217, 1
      %v378 = vrot.slane %v218, 1
      %v379 = vsel %vm346, %v377, %v378
      %v380 = vrot.slane %v219, 1
      %v381 = vsel %vm346, %v378, %v380
      %v382 = vrot.slane %v220, 1
      %v383 = vrot.slane %v221, 1
      %v384 = vsel %vm346, %v382, %v383
      %v385 = vrot.slane %v222, 1
      %v386 = vsel %vm346, %v383, %v385
      %v387 = vrot.slane %v223, 1
      %v388 = vrot.slane %v224, 1
      %v389 = vsel %vm346, %v387, %v388
      %v390 = vrot.slane %v225, 1
      %v391 = vsel %vm346, %v388, %v390
      %v392 = vrot.slane %v226, 1
      %v393 = vrot.slane %v227, 1
      %v394 = vsel %vm346, %v392, %v393
      %v395 = vrot.slane %v228, 1
      %v396 = vsel %vm346, %v393, %v395
      %v397 = vrot.slane %v229, 1
      %v398 = vrot.slane %v230, 1
      %v399 = vsel %vm346, %v397, %v398
      %v400 = vrot.slane %v231, 1
      %v401 = vsel %vm346, %v398, %v400
      %v402 = vrot.slane %v232, 1
      %v403 = vrot.slane %v233, 1
      %v404 = vsel %vm346, %v402, %v403
      %v405 = vrot.slane %v234, 1
      %v406 = vsel %vm346, %v403, %v405
      %v407 = vrot.slane %v235, 1
      %v408 = vrot.slane %v236, 1
      %v409 = vsel %vm346, %v407, %v408
      %v410 = vrot.slane %v237, 1
      %v411 = vsel %vm346, %v408, %v410
      %v412 = vrot.slane %v238, 1
      %v413 = vrot.slane %v239, 1
      %v414 = vsel %vm346, %v412, %v413
      %v415 = vrot.slane %v240, 1
      %v416 = vsel %vm346, %v413, %v415
      %v417 = vrot.slane %v241, 1
      %v418 = vrot.slane %v242, 1
      %v419 = vsel %vm346, %v417, %v418
      %v420 = vrot.slane %v243, 1
      %v421 = vsel %vm346, %v418, %v420
      %v422 = vrot.slane %v244, 1
      %v423 = vrot.slane %v245, 1
      %v424 = vsel %vm346, %v422, %v423
      %v425 = vrot.slane %v246, 1
      %v426 = vsel %vm346, %v423, %v425
      %427 = vrot.lane.b32.xlu0 %v349, 4
      %v428 = vpop.permute.xlu0 %427
      %429 = vrot.lane.b32.xlu0 %v351, 4
      %v430 = vpop.permute.xlu0 %429
      %431 = vrot.lane.b32.xlu0 %v354, 4
      %v432 = vpop.permute.xlu0 %431
      %433 = vrot.lane.b32.xlu0 %v356, 4
      %v434 = vpop.permute.xlu0 %433
      %435 = vrot.lane.b32.xlu0 %v359, 4
      %v436 = vpop.permute.xlu0 %435
      %437 = vrot.lane.b32.xlu0 %v361, 4
      %v438 = vpop.permute.xlu0 %437
      %439 = vrot.lane.b32.xlu0 %v364, 4
      %v440 = vpop.permute.xlu0 %439
      %441 = vrot.lane.b32.xlu0 %v366, 4
      %v442 = vpop.permute.xlu0 %441
      %443 = vrot.lane.b32.xlu0 %v369, 4
      %v444 = vpop.permute.xlu0 %443
      %445 = vrot.lane.b32.xlu0 %v371, 4
      %v446 = vpop.permute.xlu0 %445
      %447 = vrot.lane.b32.xlu0 %v374, 4
      %v448 = vpop.permute.xlu0 %447
      %449 = vrot.lane.b32.xlu0 %v376, 4
      %v450 = vpop.permute.xlu0 %449
      %451 = vrot.lane.b32.xlu0 %v379, 4
      %v452 = vpop.permute.xlu0 %451
      %453 = vrot.lane.b32.xlu0 %v381, 4
      %v454 = vpop.permute.xlu0 %453
      %455 = vrot.lane.b32.xlu0 %v384, 4
      %v456 = vpop.permute.xlu0 %455
      %457 = vrot.lane.b32.xlu0 %v386, 4
      %v458 = vpop.permute.xlu0 %457
      %459 = vrot.lane.b32.xlu0 %v389, 4
      %v460 = vpop.permute.xlu0 %459
      %461 = vrot.lane.b32.xlu0 %v391, 4
      %v462 = vpop.permute.xlu0 %461
      %463 = vrot.lane.b32.xlu0 %v394, 4
      %v464 = vpop.permute.xlu0 %463
      %465 = vrot.lane.b32.xlu0 %v396, 4
      %v466 = vpop.permute.xlu0 %465
      %467 = vrot.lane.b32.xlu0 %v399, 4
      %v468 = vpop.permute.xlu0 %467
      %469 = vrot.lane.b32.xlu0 %v401, 4
      %v470 = vpop.permute.xlu0 %469
      %471 = vrot.lane.b32.xlu0 %v404, 4
      %v472 = vpop.permute.xlu0 %471
      %473 = vrot.lane.b32.xlu0 %v406, 4
      %v474 = vpop.permute.xlu0 %473
      %475 = vrot.lane.b32.xlu0 %v409, 4
      %v476 = vpop.permute.xlu0 %475
      %477 = vrot.lane.b32.xlu0 %v411, 4
      %v478 = vpop.permute.xlu0 %477
      %479 = vrot.lane.b32.xlu0 %v414, 4
      %v480 = vpop.permute.xlu0 %479
      %481 = vrot.lane.b32.xlu0 %v416, 4
      %v482 = vpop.permute.xlu0 %481
      %483 = vrot.lane.b32.xlu0 %v419, 4
      %v484 = vpop.permute.xlu0 %483
      %485 = vrot.lane.b32.xlu0 %v421, 4
      %v486 = vpop.permute.xlu0 %485
      %487 = vrot.lane.b32.xlu0 %v424, 4
      %v488 = vpop.permute.xlu0 %487
      %489 = vrot.lane.b32.xlu0 %v426, 4
      %v490 = vpop.permute.xlu0 %489
      %555 = vrot.lane.b32.xlu0 %v250, 8
      %v556 = vpop.permute.xlu0 %555
      %557 = vrot.lane.b32.xlu0 %v251, 8
      %v558 = vpop.permute.xlu0 %557
      %559 = vrot.lane.b32.xlu0 %v253, 8
      %v560 = vpop.permute.xlu0 %559
      %561 = vrot.lane.b32.xlu0 %v254, 8
      %v562 = vpop.permute.xlu0 %561
      %563 = vrot.lane.b32.xlu0 %v256, 8
      %v564 = vpop.permute.xlu0 %563
      %565 = vrot.lane.b32.xlu0 %v257, 8
      %v566 = vpop.permute.xlu0 %565
      %567 = vrot.lane.b32.xlu0 %v259, 8
      %v568 = vpop.permute.xlu0 %567
      %569 = vrot.lane.b32.xlu0 %v260, 8
      %v570 = vpop.permute.xlu0 %569
      %571 = vrot.lane.b32.xlu0 %v262, 8
      %v572 = vpop.permute.xlu0 %571
      %573 = vrot.lane.b32.xlu0 %v263, 8
      %v574 = vpop.permute.xlu0 %573
      %575 = vrot.lane.b32.xlu0 %v265, 8
      %v576 = vpop.permute.xlu0 %575
      %577 = vrot.lane.b32.xlu0 %v266, 8
      %v578 = vpop.permute.xlu0 %577
      %579 = vrot.lane.b32.xlu0 %v268, 8
      %v580 = vpop.permute.xlu0 %579
      %581 = vrot.lane.b32.xlu0 %v269, 8
      %v582 = vpop.permute.xlu0 %581
      %583 = vrot.lane.b32.xlu0 %v271, 8
      %v584 = vpop.permute.xlu0 %583
      %585 = vrot.lane.b32.xlu0 %v272, 8
      %v586 = vpop.permute.xlu0 %585
      %587 = vrot.lane.b32.xlu0 %v274, 8
      %v588 = vpop.permute.xlu0 %587
      %589 = vrot.lane.b32.xlu0 %v275, 8
      %v590 = vpop.permute.xlu0 %589
      %591 = vrot.lane.b32.xlu0 %v277, 8
      %v592 = vpop.permute.xlu0 %591
      %593 = vrot.lane.b32.xlu0 %v278, 8
      %v594 = vpop.permute.xlu0 %593
      %595 = vrot.lane.b32.xlu0 %v280, 8
      %v596 = vpop.permute.xlu0 %595
      %597 = vrot.lane.b32.xlu0 %v281, 8
      %v598 = vpop.permute.xlu0 %597
      %599 = vrot.lane.b32.xlu0 %v283, 8
      %v600 = vpop.permute.xlu0 %599
      %601 = vrot.lane.b32.xlu0 %v284, 8
      %v602 = vpop.permute.xlu0 %601
      %603 = vrot.lane.b32.xlu0 %v286, 8
      %v604 = vpop.permute.xlu0 %603
      %605 = vrot.lane.b32.xlu0 %v287, 8
      %v606 = vpop.permute.xlu0 %605
      %607 = vrot.lane.b32.xlu0 %v289, 8
      %v608 = vpop.permute.xlu0 %607
      %609 = vrot.lane.b32.xlu0 %v290, 8
      %v610 = vpop.permute.xlu0 %609
      %611 = vrot.lane.b32.xlu0 %v292, 8
      %v612 = vpop.permute.xlu0 %611
      %613 = vrot.lane.b32.xlu0 %v293, 8
      %v614 = vpop.permute.xlu0 %613
      %615 = vrot.lane.b32.xlu0 %v295, 8
      %v616 = vpop.permute.xlu0 %615
      %617 = vrot.lane.b32.xlu0 %v296, 8
      %v618 = vpop.permute.xlu0 %617
      %v667 = vrot.slane %v250, 1
      %v668 = vrot.slane %v251, 1
      %v669 = vsel %vm346, %v667, %v668
      %v670 = vrot.slane %v252, 1
      %v671 = vsel %vm346, %v668, %v670
      %v672 = vrot.slane %v253, 1
      %v673 = vrot.slane %v254, 1
      %v674 = vsel %vm346, %v672, %v673
      %v675 = vrot.slane %v255, 1
      %v676 = vsel %vm346, %v673, %v675
      %v677 = vrot.slane %v256, 1
      %v678 = vrot.slane %v257, 1
      %v679 = vsel %vm346, %v677, %v678
      %v680 = vrot.slane %v258, 1
      %v681 = vsel %vm346, %v678, %v680
      %v682 = vrot.slane %v259, 1
      %v683 = vrot.slane %v260, 1
      %v684 = vsel %vm346, %v682, %v683
      %v685 = vrot.slane %v261, 1
      %v686 = vsel %vm346, %v683, %v685
      %v687 = vrot.slane %v262, 1
      %v688 = vrot.slane %v263, 1
      %v689 = vsel %vm346, %v687, %v688
      %v690 = vrot.slane %v264, 1
      %v691 = vsel %vm346, %v688, %v690
      %v692 = vrot.slane %v265, 1
      %v693 = vrot.slane %v266, 1
      %v694 = vsel %vm346, %v692, %v693
      %v695 = vrot.slane %v267, 1
      %v696 = vsel %vm346, %v693, %v695
      %v697 = vrot.slane %v268, 1
      %v698 = vrot.slane %v269, 1
      %v699 = vsel %vm346, %v697, %v698
      %v700 = vrot.slane %v270, 1
      %v701 = vsel %vm346, %v698, %v700
      %v702 = vrot.slane %v271, 1
      %v703 = vrot.slane %v272, 1
      %v704 = vsel %vm346, %v702, %v703
      %v705 = vrot.slane %v273, 1
      %v706 = vsel %vm346, %v703, %v705
      %v707 = vrot.slane %v274, 1
      %v708 = vrot.slane %v275, 1
      %v709 = vsel %vm346, %v707, %v708
      %v710 = vrot.slane %v276, 1
      %v711 = vsel %vm346, %v708, %v710
      %v712 = vrot.slane %v277, 1
      %v713 = vrot.slane %v278, 1
      %v714 = vsel %vm346, %v712, %v713
      %v715 = vrot.slane %v279, 1
      %v716 = vsel %vm346, %v713, %v715
      %v717 = vrot.slane %v280, 1
      %v718 = vrot.slane %v281, 1
      %v719 = vsel %vm346, %v717, %v718
      %v720 = vrot.slane %v282, 1
      %v721 = vsel %vm346, %v718, %v720
      %v722 = vrot.slane %v283, 1
      %v723 = vrot.slane %v284, 1
      %v724 = vsel %vm346, %v722, %v723
      %v725 = vrot.slane %v285, 1
      %v726 = vsel %vm346, %v723, %v725
      %v727 = vrot.slane %v286, 1
      %v728 = vrot.slane %v287, 1
      %v729 = vsel %vm346, %v727, %v728
      %v730 = vrot.slane %v288, 1
      %v731 = vsel %vm346, %v728, %v730
      %v732 = vrot.slane %v289, 1
      %v733 = vrot.slane %v290, 1
      %v734 = vsel %vm346, %v732, %v733
      %v735 = vrot.slane %v291, 1
      %v736 = vsel %vm346, %v733, %v735
      %v737 = vrot.slane %v292, 1
      %v738 = vrot.slane %v293, 1
      %v739 = vsel %vm346, %v737, %v738
      %v740 = vrot.slane %v294, 1
      %v741 = vsel %vm346, %v738, %v740
      %v742 = vrot.slane %v295, 1
      %v743 = vrot.slane %v296, 1
      %v744 = vsel %vm346, %v742, %v743
      %v745 = vrot.slane %v297, 1
      %v746 = vsel %vm346, %v743, %v745
      %747 = vrot.lane.b32.xlu0 %v669, 12
      %v748 = vpop.permute.xlu0 %747
      %749 = vrot.lane.b32.xlu0 %v671, 12
      %v750 = vpop.permute.xlu0 %749
      %751 = vrot.lane.b32.xlu0 %v674, 12
      %v752 = vpop.permute.xlu0 %751
      %753 = vrot.lane.b32.xlu0 %v676, 12
      %v754 = vpop.permute.xlu0 %753
      %755 = vrot.lane.b32.xlu0 %v679, 12
      %v756 = vpop.permute.xlu0 %755
      %757 = vrot.lane.b32.xlu0 %v681, 12
      %v758 = vpop.permute.xlu0 %757
      %759 = vrot.lane.b32.xlu0 %v684, 12
      %v760 = vpop.permute.xlu0 %759
      %761 = vrot.lane.b32.xlu0 %v686, 12
      %v762 = vpop.permute.xlu0 %761
      %763 = vrot.lane.b32.xlu0 %v689, 12
      %v764 = vpop.permute.xlu0 %763
      %765 = vrot.lane.b32.xlu0 %v691, 12
      %v766 = vpop.permute.xlu0 %765
      %767 = vrot.lane.b32.xlu0 %v694, 12
      %v768 = vpop.permute.xlu0 %767
      %769 = vrot.lane.b32.xlu0 %v696, 12
      %v770 = vpop.permute.xlu0 %769
      %771 = vrot.lane.b32.xlu0 %v699, 12
      %v772 = vpop.permute.xlu0 %771
      %773 = vrot.lane.b32.xlu0 %v701, 12
      %v774 = vpop.permute.xlu0 %773
      %775 = vrot.lane.b32.xlu0 %v704, 12
      %v776 = vpop.permute.xlu0 %775
      %777 = vrot.lane.b32.xlu0 %v706, 12
      %v778 = vpop.permute.xlu0 %777
      %779 = vrot.lane.b32.xlu0 %v709, 12
      %v780 = vpop.permute.xlu0 %779
      %781 = vrot.lane.b32.xlu0 %v711, 12
      %v782 = vpop.permute.xlu0 %781
      %783 = vrot.lane.b32.xlu0 %v714, 12
      %v784 = vpop.permute.xlu0 %783
      %785 = vrot.lane.b32.xlu0 %v716, 12
      %v786 = vpop.permute.xlu0 %785
      %787 = vrot.lane.b32.xlu0 %v719, 12
      %v788 = vpop.permute.xlu0 %787
      %789 = vrot.lane.b32.xlu0 %v721, 12
      %v790 = vpop.permute.xlu0 %789
      %791 = vrot.lane.b32.xlu0 %v724, 12
      %v792 = vpop.permute.xlu0 %791
      %793 = vrot.lane.b32.xlu0 %v726, 12
      %v794 = vpop.permute.xlu0 %793
      %795 = vrot.lane.b32.xlu0 %v729, 12
      %v796 = vpop.permute.xlu0 %795
      %797 = vrot.lane.b32.xlu0 %v731, 12
      %v798 = vpop.permute.xlu0 %797
      %799 = vrot.lane.b32.xlu0 %v734, 12
      %v800 = vpop.permute.xlu0 %799
      %801 = vrot.lane.b32.xlu0 %v736, 12
      %v802 = vpop.permute.xlu0 %801
      %803 = vrot.lane.b32.xlu0 %v739, 12
      %v804 = vpop.permute.xlu0 %803
      %805 = vrot.lane.b32.xlu0 %v741, 12
      %v806 = vpop.permute.xlu0 %805
      %807 = vrot.lane.b32.xlu0 %v744, 12
      %v808 = vpop.permute.xlu0 %807
      %809 = vrot.lane.b32.xlu0 %v746, 12
      %v810 = vpop.permute.xlu0 %809
      %vm843 = vcmask 31744
      %v844 = vsel %vm843, %v199, %v428
      %v845 = vsel %vm843, %v200, %v430
      %v846 = vsel %vm843, %v202, %v432
      %v847 = vsel %vm843, %v203, %v434
      %v848 = vsel %vm843, %v205, %v436
      %v849 = vsel %vm843, %v206, %v438
      %v850 = vsel %vm843, %v208, %v440
      %v851 = vsel %vm843, %v209, %v442
      %v852 = vsel %vm843, %v211, %v444
      %v853 = vsel %vm843, %v212, %v446
      %v854 = vsel %vm843, %v214, %v448
      %v855 = vsel %vm843, %v215, %v450
      %v856 = vsel %vm843, %v217, %v452
      %v857 = vsel %vm843, %v218, %v454
      %v858 = vsel %vm843, %v220, %v456
      %v859 = vsel %vm843, %v221, %v458
      %v860 = vsel %vm843, %v223, %v460
      %v861 = vsel %vm843, %v224, %v462
      %v862 = vsel %vm843, %v226, %v464
      %v863 = vsel %vm843, %v227, %v466
      %v864 = vsel %vm843, %v229, %v468
      %v865 = vsel %vm843, %v230, %v470
      %v866 = vsel %vm843, %v232, %v472
      %v867 = vsel %vm843, %v233, %v474
      %v868 = vsel %vm843, %v235, %v476
      %v869 = vsel %vm843, %v236, %v478
      %v870 = vsel %vm843, %v238, %v480
      %v871 = vsel %vm843, %v239, %v482
      %v872 = vsel %vm843, %v241, %v484
      %v873 = vsel %vm843, %v242, %v486
      %v874 = vsel %vm843, %v244, %v488
      %v875 = vsel %vm843, %v245, %v490
      %vm876 = vcmask 64512
      %v877 = vsel %vm876, %v844, %v556
      %v878 = vsel %vm876, %v845, %v558
      %v879 = vsel %vm876, %v846, %v560
      %v880 = vsel %vm876, %v847, %v562
      %v881 = vsel %vm876, %v848, %v564
      %v882 = vsel %vm876, %v849, %v566
      %v883 = vsel %vm876, %v850, %v568
      %v884 = vsel %vm876, %v851, %v570
      %v885 = vsel %vm876, %v852, %v572
      %v886 = vsel %vm876, %v853, %v574
      %v887 = vsel %vm876, %v854, %v576
      %v888 = vsel %vm876, %v855, %v578
      %v889 = vsel %vm876, %v856, %v580
      %v890 = vsel %vm876, %v857, %v582
      %v891 = vsel %vm876, %v858, %v584
      %v892 = vsel %vm876, %v859, %v586
      %v893 = vsel %vm876, %v860, %v588
      %v894 = vsel %vm876, %v861, %v590
      %v895 = vsel %vm876, %v862, %v592
      %v896 = vsel %vm876, %v863, %v594
      %v897 = vsel %vm876, %v864, %v596
      %v898 = vsel %vm876, %v865, %v598
      %v899 = vsel %vm876, %v866, %v600
      %v900 = vsel %vm876, %v867, %v602
      %v901 = vsel %vm876, %v868, %v604
      %v902 = vsel %vm876, %v869, %v606
      %v903 = vsel %vm876, %v870, %v608
      %v904 = vsel %vm876, %v871, %v610
      %v905 = vsel %vm876, %v872, %v612
      %v906 = vsel %vm876, %v873, %v614
      %v907 = vsel %vm876, %v874, %v616
      %v908 = vsel %vm876, %v875, %v618
      %vm909 = vcmask 97280
      %v910 = vsel %vm909, %v877, %v748
      %v911 = vsel %vm909, %v878, %v750
      %v912 = vsel %vm909, %v879, %v752
      %v913 = vsel %vm909, %v880, %v754
      %v914 = vsel %vm909, %v881, %v756
      %v915 = vsel %vm909, %v882, %v758
      %v916 = vsel %vm909, %v883, %v760
      %v917 = vsel %vm909, %v884, %v762
      %v918 = vsel %vm909, %v885, %v764
      %v919 = vsel %vm909, %v886, %v766
      %v920 = vsel %vm909, %v887, %v768
      %v921 = vsel %vm909, %v888, %v770
      %v922 = vsel %vm909, %v889, %v772
      %v923 = vsel %vm909, %v890, %v774
      %v924 = vsel %vm909, %v891, %v776
      %v925 = vsel %vm909, %v892, %v778
      %v926 = vsel %vm909, %v893, %v780
      %v927 = vsel %vm909, %v894, %v782
      %v928 = vsel %vm909, %v895, %v784
      %v929 = vsel %vm909, %v896, %v786
      %v930 = vsel %vm909, %v897, %v788
      %v931 = vsel %vm909, %v898, %v790
      %v932 = vsel %vm909, %v899, %v792
      %v933 = vsel %vm909, %v900, %v794
      %v934 = vsel %vm909, %v901, %v796
      %v935 = vsel %vm909, %v902, %v798
      %v936 = vsel %vm909, %v903, %v800
      %v937 = vsel %vm909, %v904, %v802
      %v938 = vsel %vm909, %v905, %v804
      %v939 = vsel %vm909, %v906, %v806
      %v940 = vsel %vm909, %v907, %v808
      %v941 = vsel %vm909, %v908, %v810
      %v942 = vld [vmem:[%s1] sm:$0xff]
      %v943 = vld [vmem:[%s1 + $0x8] sm:$0xff]
      %vm944 = vcmask 130048
      %v946 = vsel %vm944, %v910, 0
      %v949 = vsel %vm944, %v911, 0
      %v952 = vsel %vm944, %v912, 0
      %v955 = vsel %vm944, %v913, 0
      %v958 = vsel %vm944, %v914, 0
      %v961 = vsel %vm944, %v915, 0
      %v964 = vsel %vm944, %v916, 0
      %v967 = vsel %vm944, %v917, 0
      %v970 = vsel %vm944, %v918, 0
      %v973 = vsel %vm944, %v919, 0
      %v976 = vsel %vm944, %v920, 0
      %v979 = vsel %vm944, %v921, 0
      %v982 = vsel %vm944, %v922, 0
      %v985 = vsel %vm944, %v923, 0
      %v988 = vsel %vm944, %v924, 0
      %v991 = vsel %vm944, %v925, 0
      %v994 = vsel %vm944, %v926, 0
      %v997 = vsel %vm944, %v927, 0
      %v1000 = vsel %vm944, %v928, 0
      %v1003 = vsel %vm944, %v929, 0
      %v1006 = vsel %vm944, %v930, 0
      %v1009 = vsel %vm944, %v931, 0
      %v1012 = vsel %vm944, %v932, 0
      %v1015 = vsel %vm944, %v933, 0
      %v1018 = vsel %vm944, %v934, 0
      %v1021 = vsel %vm944, %v935, 0
      %v1024 = vsel %vm944, %v936, 0
      %v1027 = vsel %vm944, %v937, 0
      %v1030 = vsel %vm944, %v938, 0
      %v1033 = vsel %vm944, %v939, 0
      %v1036 = vsel %vm944, %v940, 0
      %v1039 = vsel %vm944, %v941, 0
      %1041 = vmatpush.msra.mxu0 0.0
      %1042 = vmatpush.msra.mxu0 0.0
      %1043 = vmatpush.msra.mxu0 0.0
      %1044 = vmatpush.msra.mxu0 0.0
      %1045 = vmatpush.msra.mxu0 0.0
      %1046 = vmatpush.msra.mxu0 0.0
      %1047 = vmatpush.msra.mxu0 0.0
      %1048 = vmatpush.msra.mxu0 0.0
      %1049 = vmatpush.msra.mxu0 0.0
      %1050 = vmatpush.msra.mxu0 0.0
      %1051 = vmatpush.msra.mxu0 0.0
      %1052 = vmatpush.msra.mxu0 0.0
      %1053 = vmatpush.msra.mxu0 0.0
      %1054 = vmatpush.msra.mxu0 0.0
      %1055 = vmatpush.msra.mxu0 %v943
      %1056 = vmatpush.msra.mxu0 %v942
      %1057 = vmatmul.f32.gmra.mxu0 %v946
      %v1058 = vpop.f32.mrf.mxu0
      %v1059 = vadd.f32 0.0, %v1058
      %1060 = vmatmul.f32.gmra.mxu0 %v949
      %v1061 = vpop.f32.mrf.mxu0
      %v1062 = vadd.f32 0.0, %v1061
      %1063 = vmatmul.f32.gmra.mxu0 %v952
      %v1064 = vpop.f32.mrf.mxu0
      %v1065 = vadd.f32 0.0, %v1064
      %1066 = vmatmul.f32.gmra.mxu0 %v955
      %v1067 = vpop.f32.mrf.mxu0
      %v1068 = vadd.f32 0.0, %v1067
      %1069 = vmatmul.f32.gmra.mxu0 %v958
      %v1070 = vpop.f32.mrf.mxu0
      %v1071 = vadd.f32 0.0, %v1070
      %1072 = vmatmul.f32.gmra.mxu0 %v961
      %v1073 = vpop.f32.mrf.mxu0
      %v1074 = vadd.f32 0.0, %v1073
      %1075 = vmatmul.f32.gmra.mxu0 %v964
      %v1076 = vpop.f32.mrf.mxu0
      %v1077 = vadd.f32 0.0, %v1076
      %1078 = vmatmul.f32.gmra.mxu0 %v967
      %v1079 = vpop.f32.mrf.mxu0
      %v1080 = vadd.f32 0.0, %v1079
      %1081 = vmatmul.f32.gmra.mxu0 %v970
      %v1082 = vpop.f32.mrf.mxu0
      %v1083 = vadd.f32 0.0, %v1082
      %1084 = vmatmul.f32.gmra.mxu0 %v973
      %v1085 = vpop.f32.mrf.mxu0
      %v1086 = vadd.f32 0.0, %v1085
      %1087 = vmatmul.f32.gmra.mxu0 %v976
      %v1088 = vpop.f32.mrf.mxu0
      %v1089 = vadd.f32 0.0, %v1088
      %1090 = vmatmul.f32.gmra.mxu0 %v979
      %v1091 = vpop.f32.mrf.mxu0
      %v1092 = vadd.f32 0.0, %v1091
      %1093 = vmatmul.f32.gmra.mxu0 %v982
      %v1094 = vpop.f32.mrf.mxu0
      %v1095 = vadd.f32 0.0, %v1094
      %1096 = vmatmul.f32.gmra.mxu0 %v985
      %v1097 = vpop.f32.mrf.mxu0
      %v1098 = vadd.f32 0.0, %v1097
      %1099 = vmatmul.f32.gmra.mxu0 %v988
      %v1100 = vpop.f32.mrf.mxu0
      %v1101 = vadd.f32 0.0, %v1100
      %1102 = vmatmul.f32.gmra.mxu0 %v991
      %v1103 = vpop.f32.mrf.mxu0
      %v1104 = vadd.f32 0.0, %v1103
      %1105 = vmatmul.f32.gmra.mxu0 %v994
      %v1106 = vpop.f32.mrf.mxu0
      %v1107 = vadd.f32 0.0, %v1106
      %1108 = vmatmul.f32.gmra.mxu0 %v997
      %v1109 = vpop.f32.mrf.mxu0
      %v1110 = vadd.f32 0.0, %v1109
      %1111 = vmatmul.f32.gmra.mxu0 %v1000
      %v1112 = vpop.f32.mrf.mxu0
      %v1113 = vadd.f32 0.0, %v1112
      %1114 = vmatmul.f32.gmra.mxu0 %v1003
      %v1115 = vpop.f32.mrf.mxu0
      %v1116 = vadd.f32 0.0, %v1115
      %1117 = vmatmul.f32.gmra.mxu0 %v1006
      %v1118 = vpop.f32.mrf.mxu0
      %v1119 = vadd.f32 0.0, %v1118
      %1120 = vmatmul.f32.gmra.mxu0 %v1009
      %v1121 = vpop.f32.mrf.mxu0
      %v1122 = vadd.f32 0.0, %v1121
      %1123 = vmatmul.f32.gmra.mxu0 %v1012
      %v1124 = vpop.f32.mrf.mxu0
      %v1125 = vadd.f32 0.0, %v1124
      %1126 = vmatmul.f32.gmra.mxu0 %v1015
      %v1127 = vpop.f32.mrf.mxu0
      %v1128 = vadd.f32 0.0, %v1127
      %1129 = vmatmul.f32.gmra.mxu0 %v1018
      %v1130 = vpop.f32.mrf.mxu0
      %v1131 = vadd.f32 0.0, %v1130
      %1132 = vmatmul.f32.gmra.mxu0 %v1021
      %v1133 = vpop.f32.mrf.mxu0
      %v1134 = vadd.f32 0.0, %v1133
      %1135 = vmatmul.f32.gmra.mxu0 %v1024
      %v1136 = vpop.f32.mrf.mxu0
      %v1137 = vadd.f32 0.0, %v1136
      %1138 = vmatmul.f32.gmra.mxu0 %v1027
      %v1139 = vpop.f32.mrf.mxu0
      %v1140 = vadd.f32 0.0, %v1139
      %1141 = vmatmul.f32.gmra.mxu0 %v1030
      %v1142 = vpop.f32.mrf.mxu0
      %v1143 = vadd.f32 0.0, %v1142
      %1144 = vmatmul.f32.gmra.mxu0 %v1033
      %v1145 = vpop.f32.mrf.mxu0
      %v1146 = vadd.f32 0.0, %v1145
      %1147 = vmatmul.f32.gmra.mxu0 %v1036
      %v1148 = vpop.f32.mrf.mxu0
      %v1149 = vadd.f32 0.0, %v1148
      %1150 = vmatmul.f32.gmra.mxu0 %v1039
      %v1151 = vpop.f32.mrf.mxu0
      %v1152 = vadd.f32 0.0, %v1151
      %1153 = vdwg.mxu0
      %1154 = vrot.lane.b32.xlu0 %v350, 4
      %v1155 = vpop.permute.xlu0 %1154
      %1156 = vrot.lane.b32.xlu0 %v355, 4
      %v1157 = vpop.permute.xlu0 %1156
      %1158 = vrot.lane.b32.xlu0 %v360, 4
      %v1159 = vpop.permute.xlu0 %1158
      %1160 = vrot.lane.b32.xlu0 %v365, 4
      %v1161 = vpop.permute.xlu0 %1160
      %1162 = vrot.lane.b32.xlu0 %v370, 4
      %v1163 = vpop.permute.xlu0 %1162
      %1164 = vrot.lane.b32.xlu0 %v375, 4
      %v1165 = vpop.permute.xlu0 %1164
      %1166 = vrot.lane.b32.xlu0 %v380, 4
      %v1167 = vpop.permute.xlu0 %1166
      %1168 = vrot.lane.b32.xlu0 %v385, 4
      %v1169 = vpop.permute.xlu0 %1168
      %1170 = vrot.lane.b32.xlu0 %v390, 4
      %v1171 = vpop.permute.xlu0 %1170
      %1172 = vrot.lane.b32.xlu0 %v395, 4
      %v1173 = vpop.permute.xlu0 %1172
      %1174 = vrot.lane.b32.xlu0 %v400, 4
      %v1175 = vpop.permute.xlu0 %1174
      %1176 = vrot.lane.b32.xlu0 %v405, 4
      %v1177 = vpop.permute.xlu0 %1176
      %1178 = vrot.lane.b32.xlu0 %v410, 4
      %v1179 = vpop.permute.xlu0 %1178
      %1180 = vrot.lane.b32.xlu0 %v415, 4
      %v1181 = vpop.permute.xlu0 %1180
      %1182 = vrot.lane.b32.xlu0 %v420, 4
      %v1183 = vpop.permute.xlu0 %1182
      %1184 = vrot.lane.b32.xlu0 %v425, 4
      %v1185 = vpop.permute.xlu0 %1184
      %1202 = vrot.lane.b32.xlu0 %v252, 8
      %v1203 = vpop.permute.xlu0 %1202
      %1204 = vrot.lane.b32.xlu0 %v255, 8
      %v1205 = vpop.permute.xlu0 %1204
      %1206 = vrot.lane.b32.xlu0 %v258, 8
      %v1207 = vpop.permute.xlu0 %1206
      %1208 = vrot.lane.b32.xlu0 %v261, 8
      %v1209 = vpop.permute.xlu0 %1208
      %1210 = vrot.lane.b32.xlu0 %v264, 8
      %v1211 = vpop.permute.xlu0 %1210
      %1212 = vrot.lane.b32.xlu0 %v267, 8
      %v1213 = vpop.permute.xlu0 %1212
      %1214 = vrot.lane.b32.xlu0 %v270, 8
      %v1215 = vpop.permute.xlu0 %1214
      %1216 = vrot.lane.b32.xlu0 %v273, 8
      %v1217 = vpop.permute.xlu0 %1216
      %1218 = vrot.lane.b32.xlu0 %v276, 8
      %v1219 = vpop.permute.xlu0 %1218
      %1220 = vrot.lane.b32.xlu0 %v279, 8
      %v1221 = vpop.permute.xlu0 %1220
      %1222 = vrot.lane.b32.xlu0 %v282, 8
      %v1223 = vpop.permute.xlu0 %1222
      %1224 = vrot.lane.b32.xlu0 %v285, 8
      %v1225 = vpop.permute.xlu0 %1224
      %1226 = vrot.lane.b32.xlu0 %v288, 8
      %v1227 = vpop.permute.xlu0 %1226
      %1228 = vrot.lane.b32.xlu0 %v291, 8
      %v1229 = vpop.permute.xlu0 %1228
      %1230 = vrot.lane.b32.xlu0 %v294, 8
      %v1231 = vpop.permute.xlu0 %1230
      %1232 = vrot.lane.b32.xlu0 %v297, 8
      %v1233 = vpop.permute.xlu0 %1232
      %1250 = vrot.lane.b32.xlu0 %v670, 12
      %v1251 = vpop.permute.xlu0 %1250
      %1252 = vrot.lane.b32.xlu0 %v675, 12
      %v1253 = vpop.permute.xlu0 %1252
      %1254 = vrot.lane.b32.xlu0 %v680, 12
      %v1255 = vpop.permute.xlu0 %1254
      %1256 = vrot.lane.b32.xlu0 %v685, 12
      %v1257 = vpop.permute.xlu0 %1256
      %1258 = vrot.lane.b32.xlu0 %v690, 12
      %v1259 = vpop.permute.xlu0 %1258
      %1260 = vrot.lane.b32.xlu0 %v695, 12
      %v1261 = vpop.permute.xlu0 %1260
      %1262 = vrot.lane.b32.xlu0 %v700, 12
      %v1263 = vpop.permute.xlu0 %1262
      %1264 = vrot.lane.b32.xlu0 %v705, 12
      %v1265 = vpop.permute.xlu0 %1264
      %1266 = vrot.lane.b32.xlu0 %v710, 12
      %v1267 = vpop.permute.xlu0 %1266
      %1268 = vrot.lane.b32.xlu0 %v715, 12
      %v1269 = vpop.permute.xlu0 %1268
      %1270 = vrot.lane.b32.xlu0 %v720, 12
      %v1271 = vpop.permute.xlu0 %1270
      %1272 = vrot.lane.b32.xlu0 %v725, 12
      %v1273 = vpop.permute.xlu0 %1272
      %1274 = vrot.lane.b32.xlu0 %v730, 12
      %v1275 = vpop.permute.xlu0 %1274
      %1276 = vrot.lane.b32.xlu0 %v735, 12
      %v1277 = vpop.permute.xlu0 %1276
      %1278 = vrot.lane.b32.xlu0 %v740, 12
      %v1279 = vpop.permute.xlu0 %1278
      %1280 = vrot.lane.b32.xlu0 %v745, 12
      %v1281 = vpop.permute.xlu0 %1280
      %v1298 = vsel %vm843, %v201, %v1155
      %v1299 = vsel %vm843, %v204, %v1157
      %v1300 = vsel %vm843, %v207, %v1159
      %v1301 = vsel %vm843, %v210, %v1161
      %v1302 = vsel %vm843, %v213, %v1163
      %v1303 = vsel %vm843, %v216, %v1165
      %v1304 = vsel %vm843, %v219, %v1167
      %v1305 = vsel %vm843, %v222, %v1169
      %v1306 = vsel %vm843, %v225, %v1171
      %v1307 = vsel %vm843, %v228, %v1173
      %v1308 = vsel %vm843, %v231, %v1175
      %v1309 = vsel %vm843, %v234, %v1177
      %v1310 = vsel %vm843, %v237, %v1179
      %v1311 = vsel %vm843, %v240, %v1181
      %v1312 = vsel %vm843, %v243, %v1183
      %v1313 = vsel %vm843, %v246, %v1185
      %v1314 = vsel %vm876, %v1298, %v1203
      %v1315 = vsel %vm876, %v1299, %v1205
      %v1316 = vsel %vm876, %v1300, %v1207
      %v1317 = vsel %vm876, %v1301, %v1209
      %v1318 = vsel %vm876, %v1302, %v1211
      %v1319 = vsel %vm876, %v1303, %v1213
      %v1320 = vsel %vm876, %v1304, %v1215
      %v1321 = vsel %vm876, %v1305, %v1217
      %v1322 = vsel %vm876, %v1306, %v1219
      %v1323 = vsel %vm876, %v1307, %v1221
      %v1324 = vsel %vm876, %v1308, %v1223
      %v1325 = vsel %vm876, %v1309, %v1225
      %v1326 = vsel %vm876, %v1310, %v1227
      %v1327 = vsel %vm876, %v1311, %v1229
      %v1328 = vsel %vm876, %v1312, %v1231
      %v1329 = vsel %vm876, %v1313, %v1233
      %v1330 = vsel %vm909, %v1314, %v1251
      %v1331 = vsel %vm909, %v1315, %v1253
      %v1332 = vsel %vm909, %v1316, %v1255
      %v1333 = vsel %vm909, %v1317, %v1257
      %v1334 = vsel %vm909, %v1318, %v1259
      %v1335 = vsel %vm909, %v1319, %v1261
      %v1336 = vsel %vm909, %v1320, %v1263
      %v1337 = vsel %vm909, %v1321, %v1265
      %v1338 = vsel %vm909, %v1322, %v1267
      %v1339 = vsel %vm909, %v1323, %v1269
      %v1340 = vsel %vm909, %v1324, %v1271
      %v1341 = vsel %vm909, %v1325, %v1273
      %v1342 = vsel %vm909, %v1326, %v1275
      %v1343 = vsel %vm909, %v1327, %v1277
      %v1344 = vsel %vm909, %v1328, %v1279
      %v1345 = vsel %vm909, %v1329, %v1281
      %s1346 = scalar_lea.vmem %s1, 16
      %v1347 = vld [vmem:[%s1346] sm:$0xff]
      %v1348 = vld [vmem:[%s1346 + $0x8] sm:$0xff]
      %v1365 = vrot.slane %v910, 1
      %v1366 = vrot.slane %v911, 1
      %v1367 = vsel %vm346, %v1365, %v1366
      %v1368 = vrot.slane %v1330, 1
      %v1369 = vsel %vm346, %v1366, %v1368
      %v1370 = vrot.slane %v912, 1
      %v1371 = vrot.slane %v913, 1
      %v1372 = vsel %vm346, %v1370, %v1371
      %v1373 = vrot.slane %v1331, 1
      %v1374 = vsel %vm346, %v1371, %v1373
      %v1375 = vrot.slane %v914, 1
      %v1376 = vrot.slane %v915, 1
      %v1377 = vsel %vm346, %v1375, %v1376
      %v1378 = vrot.slane %v1332, 1
      %v1379 = vsel %vm346, %v1376, %v1378
      %v1380 = vrot.slane %v916, 1
      %v1381 = vrot.slane %v917, 1
      %v1382 = vsel %vm346, %v1380, %v1381
      %v1383 = vrot.slane %v1333, 1
      %v1384 = vsel %vm346, %v1381, %v1383
      %v1385 = vrot.slane %v918, 1
      %v1386 = vrot.slane %v919, 1
      %v1387 = vsel %vm346, %v1385, %v1386
      %v1388 = vrot.slane %v1334, 1
      %v1389 = vsel %vm346, %v1386, %v1388
      %v1390 = vrot.slane %v920, 1
      %v1391 = vrot.slane %v921, 1
      %v1392 = vsel %vm346, %v1390, %v1391
      %v1393 = vrot.slane %v1335, 1
      %v1394 = vsel %vm346, %v1391, %v1393
      %v1395 = vrot.slane %v922, 1
      %v1396 = vrot.slane %v923, 1
      %v1397 = vsel %vm346, %v1395, %v1396
      %v1398 = vrot.slane %v1336, 1
      %v1399 = vsel %vm346, %v1396, %v1398
      %v1400 = vrot.slane %v924, 1
      %v1401 = vrot.slane %v925, 1
      %v1402 = vsel %vm346, %v1400, %v1401
      %v1403 = vrot.slane %v1337, 1
      %v1404 = vsel %vm346, %v1401, %v1403
      %v1405 = vrot.slane %v926, 1
      %v1406 = vrot.slane %v927, 1
      %v1407 = vsel %vm346, %v1405, %v1406
      %v1408 = vrot.slane %v1338, 1
      %v1409 = vsel %vm346, %v1406, %v1408
      %v1410 = vrot.slane %v928, 1
      %v1411 = vrot.slane %v929, 1
      %v1412 = vsel %vm346, %v1410, %v1411
      %v1413 = vrot.slane %v1339, 1
      %v1414 = vsel %vm346, %v1411, %v1413
      %v1415 = vrot.slane %v930, 1
      %v1416 = vrot.slane %v931, 1
      %v1417 = vsel %vm346, %v1415, %v1416
      %v1418 = vrot.slane %v1340, 1
      %v1419 = vsel %vm346, %v1416, %v1418
      %v1420 = vrot.slane %v932, 1
      %v1421 = vrot.slane %v933, 1
      %v1422 = vsel %vm346, %v1420, %v1421
      %v1423 = vrot.slane %v1341, 1
      %v1424 = vsel %vm346, %v1421, %v1423
      %v1425 = vrot.slane %v934, 1
      %v1426 = vrot.slane %v935, 1
      %v1427 = vsel %vm346, %v1425, %v1426
      %v1428 = vrot.slane %v1342, 1
      %v1429 = vsel %vm346, %v1426, %v1428
      %v1430 = vrot.slane %v936, 1
      %v1431 = vrot.slane %v937, 1
      %v1432 = vsel %vm346, %v1430, %v1431
      %v1433 = vrot.slane %v1343, 1
      %v1434 = vsel %vm346, %v1431, %v1433
      %v1435 = vrot.slane %v938, 1
      %v1436 = vrot.slane %v939, 1
      %v1437 = vsel %vm346, %v1435, %v1436
      %v1438 = vrot.slane %v1344, 1
      %v1439 = vsel %vm346, %v1436, %v1438
      %v1440 = vrot.slane %v940, 1
      %v1441 = vrot.slane %v941, 1
      %v1442 = vsel %vm346, %v1440, %v1441
      %v1443 = vrot.slane %v1345, 1
      %v1444 = vsel %vm346, %v1441, %v1443
      %v1445 = vsel %vm944, %v1367, 0
      %v1447 = vsel %vm944, %v1369, 0
      %v1449 = vsel %vm944, %v1372, 0
      %v1451 = vsel %vm944, %v1374, 0
      %v1453 = vsel %vm944, %v1377, 0
      %v1455 = vsel %vm944, %v1379, 0
      %v1457 = vsel %vm944, %v1382, 0
      %v1459 = vsel %vm944, %v1384, 0
      %v1461 = vsel %vm944, %v1387, 0
      %v1463 = vsel %vm944, %v1389, 0
      %v1465 = vsel %vm944, %v1392, 0
      %v1467 = vsel %vm944, %v1394, 0
      %v1469 = vsel %vm944, %v1397, 0
      %v1471 = vsel %vm944, %v1399, 0
      %v1473 = vsel %vm944, %v1402, 0
      %v1475 = vsel %vm944, %v1404, 0
      %v1477 = vsel %vm944, %v1407, 0
      %v1479 = vsel %vm944, %v1409, 0
      %v1481 = vsel %vm944, %v1412, 0
      %v1483 = vsel %vm944, %v1414, 0
      %v1485 = vsel %vm944, %v1417, 0
      %v1487 = vsel %vm944, %v1419, 0
      %v1489 = vsel %vm944, %v1422, 0
      %v1491 = vsel %vm944, %v1424, 0
      %v1493 = vsel %vm944, %v1427, 0
      %v1495 = vsel %vm944, %v1429, 0
      %v1497 = vsel %vm944, %v1432, 0
      %v1499 = vsel %vm944, %v1434, 0
      %v1501 = vsel %vm944, %v1437, 0
      %v1503 = vsel %vm944, %v1439, 0
      %v1505 = vsel %vm944, %v1442, 0
      %v1507 = vsel %vm944, %v1444, 0
      %1509 = vmatpush.msra.mxu0 0.0
      %1510 = vmatpush.msra.mxu0 0.0
      %1511 = vmatpush.msra.mxu0 0.0
      %1512 = vmatpush.msra.mxu0 0.0
      %1513 = vmatpush.msra.mxu0 0.0
      %1514 = vmatpush.msra.mxu0 0.0
      %1515 = vmatpush.msra.mxu0 0.0
      %1516 = vmatpush.msra.mxu0 0.0
      %1517 = vmatpush.msra.mxu0 0.0
      %1518 = vmatpush.msra.mxu0 0.0
      %1519 = vmatpush.msra.mxu0 0.0
      %1520 = vmatpush.msra.mxu0 0.0
      %1521 = vmatpush.msra.mxu0 0.0
      %1522 = vmatpush.msra.mxu0 0.0
      %1523 = vmatpush.msra.mxu0 %v1348
      %1524 = vmatpush.msra.mxu0 %v1347
      %1525 = vmatmul.f32.gmra.mxu0 %v1445
      %v1526 = vpop.f32.mrf.mxu0
      %v1527 = vadd.f32 0.0, %v1526
      %1528 = vmatmul.f32.gmra.mxu0 %v1447
      %v1529 = vpop.f32.mrf.mxu0
      %v1530 = vadd.f32 0.0, %v1529
      %1531 = vmatmul.f32.gmra.mxu0 %v1449
      %v1532 = vpop.f32.mrf.mxu0
      %v1533 = vadd.f32 0.0, %v1532
      %1534 = vmatmul.f32.gmra.mxu0 %v1451
      %v1535 = vpop.f32.mrf.mxu0
      %v1536 = vadd.f32 0.0, %v1535
      %1537 = vmatmul.f32.gmra.mxu0 %v1453
      %v1538 = vpop.f32.mrf.mxu0
      %v1539 = vadd.f32 0.0, %v1538
      %1540 = vmatmul.f32.gmra.mxu0 %v1455
      %v1541 = vpop.f32.mrf.mxu0
      %v1542 = vadd.f32 0.0, %v1541
      %1543 = vmatmul.f32.gmra.mxu0 %v1457
      %v1544 = vpop.f32.mrf.mxu0
      %v1545 = vadd.f32 0.0, %v1544
      %1546 = vmatmul.f32.gmra.mxu0 %v1459
      %v1547 = vpop.f32.mrf.mxu0
      %v1548 = vadd.f32 0.0, %v1547
      %1549 = vmatmul.f32.gmra.mxu0 %v1461
      %v1550 = vpop.f32.mrf.mxu0
      %v1551 = vadd.f32 0.0, %v1550
      %1552 = vmatmul.f32.gmra.mxu0 %v1463
      %v1553 = vpop.f32.mrf.mxu0
      %v1554 = vadd.f32 0.0, %v1553
      %1555 = vmatmul.f32.gmra.mxu0 %v1465
      %v1556 = vpop.f32.mrf.mxu0
      %v1557 = vadd.f32 0.0, %v1556
      %1558 = vmatmul.f32.gmra.mxu0 %v1467
      %v1559 = vpop.f32.mrf.mxu0
      %v1560 = vadd.f32 0.0, %v1559
      %1561 = vmatmul.f32.gmra.mxu0 %v1469
      %v1562 = vpop.f32.mrf.mxu0
      %v1563 = vadd.f32 0.0, %v1562
      %1564 = vmatmul.f32.gmra.mxu0 %v1471
      %v1565 = vpop.f32.mrf.mxu0
      %v1566 = vadd.f32 0.0, %v1565
      %1567 = vmatmul.f32.gmra.mxu0 %v1473
      %v1568 = vpop.f32.mrf.mxu0
      %v1569 = vadd.f32 0.0, %v1568
      %1570 = vmatmul.f32.gmra.mxu0 %v1475
      %v1571 = vpop.f32.mrf.mxu0
      %v1572 = vadd.f32 0.0, %v1571
      %1573 = vmatmul.f32.gmra.mxu0 %v1477
      %v1574 = vpop.f32.mrf.mxu0
      %v1575 = vadd.f32 0.0, %v1574
      %1576 = vmatmul.f32.gmra.mxu0 %v1479
      %v1577 = vpop.f32.mrf.mxu0
      %v1578 = vadd.f32 0.0, %v1577
      %1579 = vmatmul.f32.gmra.mxu0 %v1481
      %v1580 = vpop.f32.mrf.mxu0
      %v1581 = vadd.f32 0.0, %v1580
      %1582 = vmatmul.f32.gmra.mxu0 %v1483
      %v1583 = vpop.f32.mrf.mxu0
      %v1584 = vadd.f32 0.0, %v1583
      %1585 = vmatmul.f32.gmra.mxu0 %v1485
      %v1586 = vpop.f32.mrf.mxu0
      %v1587 = vadd.f32 0.0, %v1586
      %1588 = vmatmul.f32.gmra.mxu0 %v1487
      %v1589 = vpop.f32.mrf.mxu0
      %v1590 = vadd.f32 0.0, %v1589
      %1591 = vmatmul.f32.gmra.mxu0 %v1489
      %v1592 = vpop.f32.mrf.mxu0
      %v1593 = vadd.f32 0.0, %v1592
      %1594 = vmatmul.f32.gmra.mxu0 %v1491
      %v1595 = vpop.f32.mrf.mxu0
      %v1596 = vadd.f32 0.0, %v1595
      %1597 = vmatmul.f32.gmra.mxu0 %v1493
      %v1598 = vpop.f32.mrf.mxu0
      %v1599 = vadd.f32 0.0, %v1598
      %1600 = vmatmul.f32.gmra.mxu0 %v1495
      %v1601 = vpop.f32.mrf.mxu0
      %v1602 = vadd.f32 0.0, %v1601
      %1603 = vmatmul.f32.gmra.mxu0 %v1497
      %v1604 = vpop.f32.mrf.mxu0
      %v1605 = vadd.f32 0.0, %v1604
      %1606 = vmatmul.f32.gmra.mxu0 %v1499
      %v1607 = vpop.f32.mrf.mxu0
      %v1608 = vadd.f32 0.0, %v1607
      %1609 = vmatmul.f32.gmra.mxu0 %v1501
      %v1610 = vpop.f32.mrf.mxu0
      %v1611 = vadd.f32 0.0, %v1610
      %1612 = vmatmul.f32.gmra.mxu0 %v1503
      %v1613 = vpop.f32.mrf.mxu0
      %v1614 = vadd.f32 0.0, %v1613
      %1615 = vmatmul.f32.gmra.mxu0 %v1505
      %v1616 = vpop.f32.mrf.mxu0
      %v1617 = vadd.f32 0.0, %v1616
      %1618 = vmatmul.f32.gmra.mxu0 %v1507
      %v1619 = vpop.f32.mrf.mxu0
      %v1620 = vadd.f32 0.0, %v1619
      %1621 = vdwg.mxu0
      %1654 = vrot.lane.b32.xlu0 %v1527, 4
      %v1655 = vpop.permute.xlu0 %1654
      %1656 = vrot.lane.b32.xlu0 %v1530, 4
      %v1657 = vpop.permute.xlu0 %1656
      %1658 = vrot.lane.b32.xlu0 %v1533, 4
      %v1659 = vpop.permute.xlu0 %1658
      %1660 = vrot.lane.b32.xlu0 %v1536, 4
      %v1661 = vpop.permute.xlu0 %1660
      %1662 = vrot.lane.b32.xlu0 %v1539, 4
      %v1663 = vpop.permute.xlu0 %1662
      %1664 = vrot.lane.b32.xlu0 %v1542, 4
      %v1665 = vpop.permute.xlu0 %1664
      %1666 = vrot.lane.b32.xlu0 %v1545, 4
      %v1667 = vpop.permute.xlu0 %1666
      %1668 = vrot.lane.b32.xlu0 %v1548, 4
      %v1669 = vpop.permute.xlu0 %1668
      %1670 = vrot.lane.b32.xlu0 %v1551, 4
      %v1671 = vpop.permute.xlu0 %1670
      %1672 = vrot.lane.b32.xlu0 %v1554, 4
      %v1673 = vpop.permute.xlu0 %1672
      %1674 = vrot.lane.b32.xlu0 %v1557, 4
      %v1675 = vpop.permute.xlu0 %1674
      %1676 = vrot.lane.b32.xlu0 %v1560, 4
      %v1677 = vpop.permute.xlu0 %1676
      %1678 = vrot.lane.b32.xlu0 %v1563, 4
      %v1679 = vpop.permute.xlu0 %1678
      %1680 = vrot.lane.b32.xlu0 %v1566, 4
      %v1681 = vpop.permute.xlu0 %1680
      %1682 = vrot.lane.b32.xlu0 %v1569, 4
      %v1683 = vpop.permute.xlu0 %1682
      %1684 = vrot.lane.b32.xlu0 %v1572, 4
      %v1685 = vpop.permute.xlu0 %1684
      %1686 = vrot.lane.b32.xlu0 %v1575, 4
      %v1687 = vpop.permute.xlu0 %1686
      %1688 = vrot.lane.b32.xlu0 %v1578, 4
      %v1689 = vpop.permute.xlu0 %1688
      %1690 = vrot.lane.b32.xlu0 %v1581, 4
      %v1691 = vpop.permute.xlu0 %1690
      %1692 = vrot.lane.b32.xlu0 %v1584, 4
      %v1693 = vpop.permute.xlu0 %1692
      %1694 = vrot.lane.b32.xlu0 %v1587, 4
      %v1695 = vpop.permute.xlu0 %1694
      %1696 = vrot.lane.b32.xlu0 %v1590, 4
      %v1697 = vpop.permute.xlu0 %1696
      %1698 = vrot.lane.b32.xlu0 %v1593, 4
      %v1699 = vpop.permute.xlu0 %1698
      %1700 = vrot.lane.b32.xlu0 %v1596, 4
      %v1701 = vpop.permute.xlu0 %1700
      %1702 = vrot.lane.b32.xlu0 %v1599, 4
      %v1703 = vpop.permute.xlu0 %1702
      %1704 = vrot.lane.b32.xlu0 %v1602, 4
      %v1705 = vpop.permute.xlu0 %1704
      %1706 = vrot.lane.b32.xlu0 %v1605, 4
      %v1707 = vpop.permute.xlu0 %1706
      %1708 = vrot.lane.b32.xlu0 %v1608, 4
      %v1709 = vpop.permute.xlu0 %1708
      %1710 = vrot.lane.b32.xlu0 %v1611, 4
      %v1711 = vpop.permute.xlu0 %1710
      %1712 = vrot.lane.b32.xlu0 %v1614, 4
      %v1713 = vpop.permute.xlu0 %1712
      %1714 = vrot.lane.b32.xlu0 %v1617, 4
      %v1715 = vpop.permute.xlu0 %1714
      %1716 = vrot.lane.b32.xlu0 %v1620, 4
      %v1717 = vpop.permute.xlu0 %1716
      %v1750 = vsel %vm843, %v1059, %v1655
      %v1751 = vsel %vm843, %v1062, %v1657
      %v1752 = vsel %vm843, %v1065, %v1659
      %v1753 = vsel %vm843, %v1068, %v1661
      %v1754 = vsel %vm843, %v1071, %v1663
      %v1755 = vsel %vm843, %v1074, %v1665
      %v1756 = vsel %vm843, %v1077, %v1667
      %v1757 = vsel %vm843, %v1080, %v1669
      %v1758 = vsel %vm843, %v1083, %v1671
      %v1759 = vsel %vm843, %v1086, %v1673
      %v1760 = vsel %vm843, %v1089, %v1675
      %v1761 = vsel %vm843, %v1092, %v1677
      %v1762 = vsel %vm843, %v1095, %v1679
      %v1763 = vsel %vm843, %v1098, %v1681
      %v1764 = vsel %vm843, %v1101, %v1683
      %v1765 = vsel %vm843, %v1104, %v1685
      %v1766 = vsel %vm843, %v1107, %v1687
      %v1767 = vsel %vm843, %v1110, %v1689
      %v1768 = vsel %vm843, %v1113, %v1691
      %v1769 = vsel %vm843, %v1116, %v1693
      %v1770 = vsel %vm843, %v1119, %v1695
      %v1771 = vsel %vm843, %v1122, %v1697
      %v1772 = vsel %vm843, %v1125, %v1699
      %v1773 = vsel %vm843, %v1128, %v1701
      %v1774 = vsel %vm843, %v1131, %v1703
      %v1775 = vsel %vm843, %v1134, %v1705
      %v1776 = vsel %vm843, %v1137, %v1707
      %v1777 = vsel %vm843, %v1140, %v1709
      %v1778 = vsel %vm843, %v1143, %v1711
      %v1779 = vsel %vm843, %v1146, %v1713
      %v1780 = vsel %vm843, %v1149, %v1715
      %v1781 = vsel %vm843, %v1152, %v1717
      %s1782 = sadd.s32 %s196, 2
      %s1783 = smul.u32 %s1782, 24
      %s1784 = scalar_lea.vmem %s184, %s1783
      %v1785 = vld [vmem:[%s1784] sm:$0xff]
      %v1786 = vld [vmem:[%s1784 + $0x8] sm:$0xff]
      %v1787 = vld [vmem:[%s1784 + $0x10] sm:$0x3]
      %v1788 = vld [vmem:[%s1784 + $0x18] sm:$0xff]
      %v1789 = vld [vmem:[%s1784 + $0x20] sm:$0xff]
      %v1790 = vld [vmem:[%s1784 + $0x28] sm:$0x3]
      %v1791 = vld [vmem:[%s1784 + $0x30] sm:$0xff]
      %v1792 = vld [vmem:[%s1784 + $0x38] sm:$0xff]
      %v1793 = vld [vmem:[%s1784 + $0x40] sm:$0x3]
      %v1794 = vld [vmem:[%s1784 + $0x48] sm:$0xff]
      %v1795 = vld [vmem:[%s1784 + $0x50] sm:$0xff]
      %v1796 = vld [vmem:[%s1784 + $0x58] sm:$0x3]
      %v1797 = vld [vmem:[%s1784 + $0x60] sm:$0xff]
      %v1798 = vld [vmem:[%s1784 + $0x68] sm:$0xff]
      %v1799 = vld [vmem:[%s1784 + $0x70] sm:$0x3]
      %v1800 = vld [vmem:[%s1784 + $0x78] sm:$0xff]
      %v1801 = vld [vmem:[%s1784 + $0x80] sm:$0xff]
      %v1802 = vld [vmem:[%s1784 + $0x88] sm:$0x3]
      %v1803 = vld [vmem:[%s1784 + $0x90] sm:$0xff]
      %v1804 = vld [vmem:[%s1784 + $0x98] sm:$0xff]
      %v1805 = vld [vmem:[%s1784 + $0xa0] sm:$0x3]
      %v1806 = vld [vmem:[%s1784 + $0xa8] sm:$0xff]
      %v1807 = vld [vmem:[%s1784 + $0xb0] sm:$0xff]
      %v1808 = vld [vmem:[%s1784 + $0xb8] sm:$0x3]
      %v1809 = vld [vmem:[%s1784 + $0xc0] sm:$0xff]
      %v1810 = vld [vmem:[%s1784 + $0xc8] sm:$0xff]
      %v1811 = vld [vmem:[%s1784 + $0xd0] sm:$0x3]
      %v1812 = vld [vmem:[%s1784 + $0xd8] sm:$0xff]
      %v1813 = vld [vmem:[%s1784 + $0xe0] sm:$0xff]
      %v1814 = vld [vmem:[%s1784 + $0xe8] sm:$0x3]
      %v1815 = vld [vmem:[%s1784 + $0xf0] sm:$0xff]
      %v1816 = vld [vmem:[%s1784 + $0xf8] sm:$0xff]
      %v1817 = vld [vmem:[%s1784 + $0x100] sm:$0x3]
      %v1818 = vld [vmem:[%s1784 + $0x108] sm:$0xff]
      %v1819 = vld [vmem:[%s1784 + $0x110] sm:$0xff]
      %v1820 = vld [vmem:[%s1784 + $0x118] sm:$0x3]
      %v1821 = vld [vmem:[%s1784 + $0x120] sm:$0xff]
      %v1822 = vld [vmem:[%s1784 + $0x128] sm:$0xff]
      %v1823 = vld [vmem:[%s1784 + $0x130] sm:$0x3]
      %v1824 = vld [vmem:[%s1784 + $0x138] sm:$0xff]
      %v1825 = vld [vmem:[%s1784 + $0x140] sm:$0xff]
      %v1826 = vld [vmem:[%s1784 + $0x148] sm:$0x3]
      %v1827 = vld [vmem:[%s1784 + $0x150] sm:$0xff]
      %v1828 = vld [vmem:[%s1784 + $0x158] sm:$0xff]
      %v1829 = vld [vmem:[%s1784 + $0x160] sm:$0x3]
      %v1830 = vld [vmem:[%s1784 + $0x168] sm:$0xff]
      %v1831 = vld [vmem:[%s1784 + $0x170] sm:$0xff]
      %v1832 = vld [vmem:[%s1784 + $0x178] sm:$0x3]
      %1833 = vrot.lane.b32.xlu0 %v669, 4
      %v1834 = vpop.permute.xlu0 %1833
      %1835 = vrot.lane.b32.xlu0 %v671, 4
      %v1836 = vpop.permute.xlu0 %1835
      %1837 = vrot.lane.b32.xlu0 %v674, 4
      %v1838 = vpop.permute.xlu0 %1837
      %1839 = vrot.lane.b32.xlu0 %v676, 4
      %v1840 = vpop.permute.xlu0 %1839
      %1841 = vrot.lane.b32.xlu0 %v679, 4
      %v1842 = vpop.permute.xlu0 %1841
      %1843 = vrot.lane.b32.xlu0 %v681, 4
      %v1844 = vpop.permute.xlu0 %1843
      %1845 = vrot.lane.b32.xlu0 %v684, 4
      %v1846 = vpop.permute.xlu0 %1845
      %1847 = vrot.lane.b32.xlu0 %v686, 4
      %v1848 = vpop.permute.xlu0 %1847
      %1849 = vrot.lane.b32.xlu0 %v689, 4
      %v1850 = vpop.permute.xlu0 %1849
      %1851 = vrot.lane.b32.xlu0 %v691, 4
      %v1852 = vpop.permute.xlu0 %1851
      %1853 = vrot.lane.b32.xlu0 %v694, 4
      %v1854 = vpop.permute.xlu0 %1853
      %1855 = vrot.lane.b32.xlu0 %v696, 4
      %v1856 = vpop.permute.xlu0 %1855
      %1857 = vrot.lane.b32.xlu0 %v699, 4
      %v1858 = vpop.permute.xlu0 %1857
      %1859 = vrot.lane.b32.xlu0 %v701, 4
      %v1860 = vpop.permute.xlu0 %1859
      %1861 = vrot.lane.b32.xlu0 %v704, 4
      %v1862 = vpop.permute.xlu0 %1861
      %1863 = vrot.lane.b32.xlu0 %v706, 4
      %v1864 = vpop.permute.xlu0 %1863
      %1865 = vrot.lane.b32.xlu0 %v709, 4
      %v1866 = vpop.permute.xlu0 %1865
      %1867 = vrot.lane.b32.xlu0 %v711, 4
      %v1868 = vpop.permute.xlu0 %1867
      %1869 = vrot.lane.b32.xlu0 %v714, 4
      %v1870 = vpop.permute.xlu0 %1869
      %1871 = vrot.lane.b32.xlu0 %v716, 4
      %v1872 = vpop.permute.xlu0 %1871
      %1873 = vrot.lane.b32.xlu0 %v719, 4
      %v1874 = vpop.permute.xlu0 %1873
      %1875 = vrot.lane.b32.xlu0 %v721, 4
      %v1876 = vpop.permute.xlu0 %1875
      %1877 = vrot.lane.b32.xlu0 %v724, 4
      %v1878 = vpop.permute.xlu0 %1877
      %1879 = vrot.lane.b32.xlu0 %v726, 4
      %v1880 = vpop.permute.xlu0 %1879
      %1881 = vrot.lane.b32.xlu0 %v729, 4
      %v1882 = vpop.permute.xlu0 %1881
      %1883 = vrot.lane.b32.xlu0 %v731, 4
      %v1884 = vpop.permute.xlu0 %1883
      %1885 = vrot.lane.b32.xlu0 %v734, 4
      %v1886 = vpop.permute.xlu0 %1885
      %1887 = vrot.lane.b32.xlu0 %v736, 4
      %v1888 = vpop.permute.xlu0 %1887
      %1889 = vrot.lane.b32.xlu0 %v739, 4
      %v1890 = vpop.permute.xlu0 %1889
      %1891 = vrot.lane.b32.xlu0 %v741, 4
      %v1892 = vpop.permute.xlu0 %1891
      %1893 = vrot.lane.b32.xlu0 %v744, 4
      %v1894 = vpop.permute.xlu0 %1893
      %1895 = vrot.lane.b32.xlu0 %v746, 4
      %v1896 = vpop.permute.xlu0 %1895
      %1961 = vrot.lane.b32.xlu0 %v1785, 8
      %v1962 = vpop.permute.xlu0 %1961
      %1963 = vrot.lane.b32.xlu0 %v1786, 8
      %v1964 = vpop.permute.xlu0 %1963
      %1965 = vrot.lane.b32.xlu0 %v1788, 8
      %v1966 = vpop.permute.xlu0 %1965
      %1967 = vrot.lane.b32.xlu0 %v1789, 8
      %v1968 = vpop.permute.xlu0 %1967
      %1969 = vrot.lane.b32.xlu0 %v1791, 8
      %v1970 = vpop.permute.xlu0 %1969
      %1971 = vrot.lane.b32.xlu0 %v1792, 8
      %v1972 = vpop.permute.xlu0 %1971
      %1973 = vrot.lane.b32.xlu0 %v1794, 8
      %v1974 = vpop.permute.xlu0 %1973
      %1975 = vrot.lane.b32.xlu0 %v1795, 8
      %v1976 = vpop.permute.xlu0 %1975
      %1977 = vrot.lane.b32.xlu0 %v1797, 8
      %v1978 = vpop.permute.xlu0 %1977
      %1979 = vrot.lane.b32.xlu0 %v1798, 8
      %v1980 = vpop.permute.xlu0 %1979
      %1981 = vrot.lane.b32.xlu0 %v1800, 8
      %v1982 = vpop.permute.xlu0 %1981
      %1983 = vrot.lane.b32.xlu0 %v1801, 8
      %v1984 = vpop.permute.xlu0 %1983
      %1985 = vrot.lane.b32.xlu0 %v1803, 8
      %v1986 = vpop.permute.xlu0 %1985
      %1987 = vrot.lane.b32.xlu0 %v1804, 8
      %v1988 = vpop.permute.xlu0 %1987
      %1989 = vrot.lane.b32.xlu0 %v1806, 8
      %v1990 = vpop.permute.xlu0 %1989
      %1991 = vrot.lane.b32.xlu0 %v1807, 8
      %v1992 = vpop.permute.xlu0 %1991
      %1993 = vrot.lane.b32.xlu0 %v1809, 8
      %v1994 = vpop.permute.xlu0 %1993
      %1995 = vrot.lane.b32.xlu0 %v1810, 8
      %v1996 = vpop.permute.xlu0 %1995
      %1997 = vrot.lane.b32.xlu0 %v1812, 8
      %v1998 = vpop.permute.xlu0 %1997
      %1999 = vrot.lane.b32.xlu0 %v1813, 8
      %v2000 = vpop.permute.xlu0 %1999
      %2001 = vrot.lane.b32.xlu0 %v1815, 8
      %v2002 = vpop.permute.xlu0 %2001
      %2003 = vrot.lane.b32.xlu0 %v1816, 8
      %v2004 = vpop.permute.xlu0 %2003
      %2005 = vrot.lane.b32.xlu0 %v1818, 8
      %v2006 = vpop.permute.xlu0 %2005
      %2007 = vrot.lane.b32.xlu0 %v1819, 8
      %v2008 = vpop.permute.xlu0 %2007
      %2009 = vrot.lane.b32.xlu0 %v1821, 8
      %v2010 = vpop.permute.xlu0 %2009
      %2011 = vrot.lane.b32.xlu0 %v1822, 8
      %v2012 = vpop.permute.xlu0 %2011
      %2013 = vrot.lane.b32.xlu0 %v1824, 8
      %v2014 = vpop.permute.xlu0 %2013
      %2015 = vrot.lane.b32.xlu0 %v1825, 8
      %v2016 = vpop.permute.xlu0 %2015
      %2017 = vrot.lane.b32.xlu0 %v1827, 8
      %v2018 = vpop.permute.xlu0 %2017
      %2019 = vrot.lane.b32.xlu0 %v1828, 8
      %v2020 = vpop.permute.xlu0 %2019
      %2021 = vrot.lane.b32.xlu0 %v1830, 8
      %v2022 = vpop.permute.xlu0 %2021
      %2023 = vrot.lane.b32.xlu0 %v1831, 8
      %v2024 = vpop.permute.xlu0 %2023
      %v2073 = vrot.slane %v1785, 1
      %v2074 = vrot.slane %v1786, 1
      %v2075 = vsel %vm346, %v2073, %v2074
      %v2076 = vrot.slane %v1787, 1
      %v2077 = vsel %vm346, %v2074, %v2076
      %v2078 = vrot.slane %v1788, 1
      %v2079 = vrot.slane %v1789, 1
      %v2080 = vsel %vm346, %v2078, %v2079
      %v2081 = vrot.slane %v1790, 1
      %v2082 = vsel %vm346, %v2079, %v2081
      %v2083 = vrot.slane %v1791, 1
      %v2084 = vrot.slane %v1792, 1
      %v2085 = vsel %vm346, %v2083, %v2084
      %v2086 = vrot.slane %v1793, 1
      %v2087 = vsel %vm346, %v2084, %v2086
      %v2088 = vrot.slane %v1794, 1
      %v2089 = vrot.slane %v1795, 1
      %v2090 = vsel %vm346, %v2088, %v2089
      %v2091 = vrot.slane %v1796, 1
      %v2092 = vsel %vm346, %v2089, %v2091
      %v2093 = vrot.slane %v1797, 1
      %v2094 = vrot.slane %v1798, 1
      %v2095 = vsel %vm346, %v2093, %v2094
      %v2096 = vrot.slane %v1799, 1
      %v2097 = vsel %vm346, %v2094, %v2096
      %v2098 = vrot.slane %v1800, 1
      %v2099 = vrot.slane %v1801, 1
      %v2100 = vsel %vm346, %v2098, %v2099
      %v2101 = vrot.slane %v1802, 1
      %v2102 = vsel %vm346, %v2099, %v2101
      %v2103 = vrot.slane %v1803, 1
      %v2104 = vrot.slane %v1804, 1
      %v2105 = vsel %vm346, %v2103, %v2104
      %v2106 = vrot.slane %v1805, 1
      %v2107 = vsel %vm346, %v2104, %v2106
      %v2108 = vrot.slane %v1806, 1
      %v2109 = vrot.slane %v1807, 1
      %v2110 = vsel %vm346, %v2108, %v2109
      %v2111 = vrot.slane %v1808, 1
      %v2112 = vsel %vm346, %v2109, %v2111
      %v2113 = vrot.slane %v1809, 1
      %v2114 = vrot.slane %v1810, 1
      %v2115 = vsel %vm346, %v2113, %v2114
      %v2116 = vrot.slane %v1811, 1
      %v2117 = vsel %vm346, %v2114, %v2116
      %v2118 = vrot.slane %v1812, 1
      %v2119 = vrot.slane %v1813, 1
      %v2120 = vsel %vm346, %v2118, %v2119
      %v2121 = vrot.slane %v1814, 1
      %v2122 = vsel %vm346, %v2119, %v2121
      %v2123 = vrot.slane %v1815, 1
      %v2124 = vrot.slane %v1816, 1
      %v2125 = vsel %vm346, %v2123, %v2124
      %v2126 = vrot.slane %v1817, 1
      %v2127 = vsel %vm346, %v2124, %v2126
      %v2128 = vrot.slane %v1818, 1
      %v2129 = vrot.slane %v1819, 1
      %v2130 = vsel %vm346, %v2128, %v2129
      %v2131 = vrot.slane %v1820, 1
      %v2132 = vsel %vm346, %v2129, %v2131
      %v2133 = vrot.slane %v1821, 1
      %v2134 = vrot.slane %v1822, 1
      %v2135 = vsel %vm346, %v2133, %v2134
      %v2136 = vrot.slane %v1823, 1
      %v2137 = vsel %vm346, %v2134, %v2136
      %v2138 = vrot.slane %v1824, 1
      %v2139 = vrot.slane %v1825, 1
      %v2140 = vsel %vm346, %v2138, %v2139
      %v2141 = vrot.slane %v1826, 1
      %v2142 = vsel %vm346, %v2139, %v2141
      %v2143 = vrot.slane %v1827, 1
      %v2144 = vrot.slane %v1828, 1
      %v2145 = vsel %vm346, %v2143, %v2144
      %v2146 = vrot.slane %v1829, 1
      %v2147 = vsel %vm346, %v2144, %v2146
      %v2148 = vrot.slane %v1830, 1
      %v2149 = vrot.slane %v1831, 1
      %v2150 = vsel %vm346, %v2148, %v2149
      %v2151 = vrot.slane %v1832, 1
      %v2152 = vsel %vm346, %v2149, %v2151
      %2153 = vrot.lane.b32.xlu0 %v2075, 12
      %v2154 = vpop.permute.xlu0 %2153
      %2155 = vrot.lane.b32.xlu0 %v2077, 12
      %v2156 = vpop.permute.xlu0 %2155
      %2157 = vrot.lane.b32.xlu0 %v2080, 12
      %v2158 = vpop.permute.xlu0 %2157
      %2159 = vrot.lane.b32.xlu0 %v2082, 12
      %v2160 = vpop.permute.xlu0 %2159
      %2161 = vrot.lane.b32.xlu0 %v2085, 12
      %v2162 = vpop.permute.xlu0 %2161
      %2163 = vrot.lane.b32.xlu0 %v2087, 12
      %v2164 = vpop.permute.xlu0 %2163
      %2165 = vrot.lane.b32.xlu0 %v2090, 12
      %v2166 = vpop.permute.xlu0 %2165
      %2167 = vrot.lane.b32.xlu0 %v2092, 12
      %v2168 = vpop.permute.xlu0 %2167
      %2169 = vrot.lane.b32.xlu0 %v2095, 12
      %v2170 = vpop.permute.xlu0 %2169
      %2171 = vrot.lane.b32.xlu0 %v2097, 12
      %v2172 = vpop.permute.xlu0 %2171
      %2173 = vrot.lane.b32.xlu0 %v2100, 12
      %v2174 = vpop.permute.xlu0 %2173
      %2175 = vrot.lane.b32.xlu0 %v2102, 12
      %v2176 = vpop.permute.xlu0 %2175
      %2177 = vrot.lane.b32.xlu0 %v2105, 12
      %v2178 = vpop.permute.xlu0 %2177
      %2179 = vrot.lane.b32.xlu0 %v2107, 12
      %v2180 = vpop.permute.xlu0 %2179
      %2181 = vrot.lane.b32.xlu0 %v2110, 12
      %v2182 = vpop.permute.xlu0 %2181
      %2183 = vrot.lane.b32.xlu0 %v2112, 12
      %v2184 = vpop.permute.xlu0 %2183
      %2185 = vrot.lane.b32.xlu0 %v2115, 12
      %v2186 = vpop.permute.xlu0 %2185
      %2187 = vrot.lane.b32.xlu0 %v2117, 12
      %v2188 = vpop.permute.xlu0 %2187
      %2189 = vrot.lane.b32.xlu0 %v2120, 12
      %v2190 = vpop.permute.xlu0 %2189
      %2191 = vrot.lane.b32.xlu0 %v2122, 12
      %v2192 = vpop.permute.xlu0 %2191
      %2193 = vrot.lane.b32.xlu0 %v2125, 12
      %v2194 = vpop.permute.xlu0 %2193
      %2195 = vrot.lane.b32.xlu0 %v2127, 12
      %v2196 = vpop.permute.xlu0 %2195
      %2197 = vrot.lane.b32.xlu0 %v2130, 12
      %v2198 = vpop.permute.xlu0 %2197
      %2199 = vrot.lane.b32.xlu0 %v2132, 12
      %v2200 = vpop.permute.xlu0 %2199
      %2201 = vrot.lane.b32.xlu0 %v2135, 12
      %v2202 = vpop.permute.xlu0 %2201
      %2203 = vrot.lane.b32.xlu0 %v2137, 12
      %v2204 = vpop.permute.xlu0 %2203
      %2205 = vrot.lane.b32.xlu0 %v2140, 12
      %v2206 = vpop.permute.xlu0 %2205
      %2207 = vrot.lane.b32.xlu0 %v2142, 12
      %v2208 = vpop.permute.xlu0 %2207
      %2209 = vrot.lane.b32.xlu0 %v2145, 12
      %v2210 = vpop.permute.xlu0 %2209
      %2211 = vrot.lane.b32.xlu0 %v2147, 12
      %v2212 = vpop.permute.xlu0 %2211
      %2213 = vrot.lane.b32.xlu0 %v2150, 12
      %v2214 = vpop.permute.xlu0 %2213
      %2215 = vrot.lane.b32.xlu0 %v2152, 12
      %v2216 = vpop.permute.xlu0 %2215
      %v2249 = vsel %vm843, %v250, %v1834
      %v2250 = vsel %vm843, %v251, %v1836
      %v2251 = vsel %vm843, %v253, %v1838
      %v2252 = vsel %vm843, %v254, %v1840
      %v2253 = vsel %vm843, %v256, %v1842
      %v2254 = vsel %vm843, %v257, %v1844
      %v2255 = vsel %vm843, %v259, %v1846
      %v2256 = vsel %vm843, %v260, %v1848
      %v2257 = vsel %vm843, %v262, %v1850
      %v2258 = vsel %vm843, %v263, %v1852
      %v2259 = vsel %vm843, %v265, %v1854
      %v2260 = vsel %vm843, %v266, %v1856
      %v2261 = vsel %vm843, %v268, %v1858
      %v2262 = vsel %vm843, %v269, %v1860
      %v2263 = vsel %vm843, %v271, %v1862
      %v2264 = vsel %vm843, %v272, %v1864
      %v2265 = vsel %vm843, %v274, %v1866
      %v2266 = vsel %vm843, %v275, %v1868
      %v2267 = vsel %vm843, %v277, %v1870
      %v2268 = vsel %vm843, %v278, %v1872
      %v2269 = vsel %vm843, %v280, %v1874
      %v2270 = vsel %vm843, %v281, %v1876
      %v2271 = vsel %vm843, %v283, %v1878
      %v2272 = vsel %vm843, %v284, %v1880
      %v2273 = vsel %vm843, %v286, %v1882
      %v2274 = vsel %vm843, %v287, %v1884
      %v2275 = vsel %vm843, %v289, %v1886
      %v2276 = vsel %vm843, %v290, %v1888
      %v2277 = vsel %vm843, %v292, %v1890
      %v2278 = vsel %vm843, %v293, %v1892
      %v2279 = vsel %vm843, %v295, %v1894
      %v2280 = vsel %vm843, %v296, %v1896
      %v2281 = vsel %vm876, %v2249, %v1962
      %v2282 = vsel %vm876, %v2250, %v1964
      %v2283 = vsel %vm876, %v2251, %v1966
      %v2284 = vsel %vm876, %v2252, %v1968
      %v2285 = vsel %vm876, %v2253, %v1970
      %v2286 = vsel %vm876, %v2254, %v1972
      %v2287 = vsel %vm876, %v2255, %v1974
      %v2288 = vsel %vm876, %v2256, %v1976
      %v2289 = vsel %vm876, %v2257, %v1978
      %v2290 = vsel %vm876, %v2258, %v1980
      %v2291 = vsel %vm876, %v2259, %v1982
      %v2292 = vsel %vm876, %v2260, %v1984
      %v2293 = vsel %vm876, %v2261, %v1986
      %v2294 = vsel %vm876, %v2262, %v1988
      %v2295 = vsel %vm876, %v2263, %v1990
      %v2296 = vsel %vm876, %v2264, %v1992
      %v2297 = vsel %vm876, %v2265, %v1994
      %v2298 = vsel %vm876, %v2266, %v1996
      %v2299 = vsel %vm876, %v2267, %v1998
      %v2300 = vsel %vm876, %v2268, %v2000
      %v2301 = vsel %vm876, %v2269, %v2002
      %v2302 = vsel %vm876, %v2270, %v2004
      %v2303 = vsel %vm876, %v2271, %v2006
      %v2304 = vsel %vm876, %v2272, %v2008
      %v2305 = vsel %vm876, %v2273, %v2010
      %v2306 = vsel %vm876, %v2274, %v2012
      %v2307 = vsel %vm876, %v2275, %v2014
      %v2308 = vsel %vm876, %v2276, %v2016
      %v2309 = vsel %vm876, %v2277, %v2018
      %v2310 = vsel %vm876, %v2278, %v2020
      %v2311 = vsel %vm876, %v2279, %v2022
      %v2312 = vsel %vm876, %v2280, %v2024
      %v2313 = vsel %vm909, %v2281, %v2154
      %v2314 = vsel %vm909, %v2282, %v2156
      %v2315 = vsel %vm909, %v2283, %v2158
      %v2316 = vsel %vm909, %v2284, %v2160
      %v2317 = vsel %vm909, %v2285, %v2162
      %v2318 = vsel %vm909, %v2286, %v2164
      %v2319 = vsel %vm909, %v2287, %v2166
      %v2320 = vsel %vm909, %v2288, %v2168
      %v2321 = vsel %vm909, %v2289, %v2170
      %v2322 = vsel %vm909, %v2290, %v2172
      %v2323 = vsel %vm909, %v2291, %v2174
      %v2324 = vsel %vm909, %v2292, %v2176
      %v2325 = vsel %vm909, %v2293, %v2178
      %v2326 = vsel %vm909, %v2294, %v2180
      %v2327 = vsel %vm909, %v2295, %v2182
      %v2328 = vsel %vm909, %v2296, %v2184
      %v2329 = vsel %vm909, %v2297, %v2186
      %v2330 = vsel %vm909, %v2298, %v2188
      %v2331 = vsel %vm909, %v2299, %v2190
      %v2332 = vsel %vm909, %v2300, %v2192
      %v2333 = vsel %vm909, %v2301, %v2194
      %v2334 = vsel %vm909, %v2302, %v2196
      %v2335 = vsel %vm909, %v2303, %v2198
      %v2336 = vsel %vm909, %v2304, %v2200
      %v2337 = vsel %vm909, %v2305, %v2202
      %v2338 = vsel %vm909, %v2306, %v2204
      %v2339 = vsel %vm909, %v2307, %v2206
      %v2340 = vsel %vm909, %v2308, %v2208
      %v2341 = vsel %vm909, %v2309, %v2210
      %v2342 = vsel %vm909, %v2310, %v2212
      %v2343 = vsel %vm909, %v2311, %v2214
      %v2344 = vsel %vm909, %v2312, %v2216
      %s2345 = scalar_lea.vmem %s1, 32
      %v2346 = vld [vmem:[%s2345] sm:$0xff]
      %v2347 = vld [vmem:[%s2345 + $0x8] sm:$0xff]
      %v2349 = vsel %vm944, %v2313, 0
      %v2352 = vsel %vm944, %v2314, 0
      %v2355 = vsel %vm944, %v2315, 0
      %v2358 = vsel %vm944, %v2316, 0
      %v2361 = vsel %vm944, %v2317, 0
      %v2364 = vsel %vm944, %v2318, 0
      %v2367 = vsel %vm944, %v2319, 0
      %v2370 = vsel %vm944, %v2320, 0
      %v2373 = vsel %vm944, %v2321, 0
      %v2376 = vsel %vm944, %v2322, 0
      %v2379 = vsel %vm944, %v2323, 0
      %v2382 = vsel %vm944, %v2324, 0
      %v2385 = vsel %vm944, %v2325, 0
      %v2388 = vsel %vm944, %v2326, 0
      %v2391 = vsel %vm944, %v2327, 0
      %v2394 = vsel %vm944, %v2328, 0
      %v2397 = vsel %vm944, %v2329, 0
      %v2400 = vsel %vm944, %v2330, 0
      %v2403 = vsel %vm944, %v2331, 0
      %v2406 = vsel %vm944, %v2332, 0
      %v2409 = vsel %vm944, %v2333, 0
      %v2412 = vsel %vm944, %v2334, 0
      %v2415 = vsel %vm944, %v2335, 0
      %v2418 = vsel %vm944, %v2336, 0
      %v2421 = vsel %vm944, %v2337, 0
      %v2424 = vsel %vm944, %v2338, 0
      %v2427 = vsel %vm944, %v2339, 0
      %v2430 = vsel %vm944, %v2340, 0
      %v2433 = vsel %vm944, %v2341, 0
      %v2436 = vsel %vm944, %v2342, 0
      %v2439 = vsel %vm944, %v2343, 0
      %v2442 = vsel %vm944, %v2344, 0
      %2444 = vmatpush.msra.mxu0 0.0
      %2445 = vmatpush.msra.mxu0 0.0
      %2446 = vmatpush.msra.mxu0 0.0
      %2447 = vmatpush.msra.mxu0 0.0
      %2448 = vmatpush.msra.mxu0 0.0
      %2449 = vmatpush.msra.mxu0 0.0
      %2450 = vmatpush.msra.mxu0 0.0
      %2451 = vmatpush.msra.mxu0 0.0
      %2452 = vmatpush.msra.mxu0 0.0
      %2453 = vmatpush.msra.mxu0 0.0
      %2454 = vmatpush.msra.mxu0 0.0
      %2455 = vmatpush.msra.mxu0 0.0
      %2456 = vmatpush.msra.mxu0 0.0
      %2457 = vmatpush.msra.mxu0 0.0
      %2458 = vmatpush.msra.mxu0 %v2347
      %2459 = vmatpush.msra.mxu0 %v2346
      %2460 = vmatmul.f32.gmra.mxu0 %v2349
      %v2461 = vpop.f32.mrf.mxu0
      %v2462 = vadd.f32 0.0, %v2461
      %2463 = vmatmul.f32.gmra.mxu0 %v2352
      %v2464 = vpop.f32.mrf.mxu0
      %v2465 = vadd.f32 0.0, %v2464
      %2466 = vmatmul.f32.gmra.mxu0 %v2355
      %v2467 = vpop.f32.mrf.mxu0
      %v2468 = vadd.f32 0.0, %v2467
      %2469 = vmatmul.f32.gmra.mxu0 %v2358
      %v2470 = vpop.f32.mrf.mxu0
      %v2471 = vadd.f32 0.0, %v2470
      %2472 = vmatmul.f32.gmra.mxu0 %v2361
      %v2473 = vpop.f32.mrf.mxu0
      %v2474 = vadd.f32 0.0, %v2473
      %2475 = vmatmul.f32.gmra.mxu0 %v2364
      %v2476 = vpop.f32.mrf.mxu0
      %v2477 = vadd.f32 0.0, %v2476
      %2478 = vmatmul.f32.gmra.mxu0 %v2367
      %v2479 = vpop.f32.mrf.mxu0
      %v2480 = vadd.f32 0.0, %v2479
      %2481 = vmatmul.f32.gmra.mxu0 %v2370
      %v2482 = vpop.f32.mrf.mxu0
      %v2483 = vadd.f32 0.0, %v2482
      %2484 = vmatmul.f32.gmra.mxu0 %v2373
      %v2485 = vpop.f32.mrf.mxu0
      %v2486 = vadd.f32 0.0, %v2485
      %2487 = vmatmul.f32.gmra.mxu0 %v2376
      %v2488 = vpop.f32.mrf.mxu0
      %v2489 = vadd.f32 0.0, %v2488
      %2490 = vmatmul.f32.gmra.mxu0 %v2379
      %v2491 = vpop.f32.mrf.mxu0
      %v2492 = vadd.f32 0.0, %v2491
      %2493 = vmatmul.f32.gmra.mxu0 %v2382
      %v2494 = vpop.f32.mrf.mxu0
      %v2495 = vadd.f32 0.0, %v2494
      %2496 = vmatmul.f32.gmra.mxu0 %v2385
      %v2497 = vpop.f32.mrf.mxu0
      %v2498 = vadd.f32 0.0, %v2497
      %2499 = vmatmul.f32.gmra.mxu0 %v2388
      %v2500 = vpop.f32.mrf.mxu0
      %v2501 = vadd.f32 0.0, %v2500
      %2502 = vmatmul.f32.gmra.mxu0 %v2391
      %v2503 = vpop.f32.mrf.mxu0
      %v2504 = vadd.f32 0.0, %v2503
      %2505 = vmatmul.f32.gmra.mxu0 %v2394
      %v2506 = vpop.f32.mrf.mxu0
      %v2507 = vadd.f32 0.0, %v2506
      %2508 = vmatmul.f32.gmra.mxu0 %v2397
      %v2509 = vpop.f32.mrf.mxu0
      %v2510 = vadd.f32 0.0, %v2509
      %2511 = vmatmul.f32.gmra.mxu0 %v2400
      %v2512 = vpop.f32.mrf.mxu0
      %v2513 = vadd.f32 0.0, %v2512
      %2514 = vmatmul.f32.gmra.mxu0 %v2403
      %v2515 = vpop.f32.mrf.mxu0
      %v2516 = vadd.f32 0.0, %v2515
      %2517 = vmatmul.f32.gmra.mxu0 %v2406
      %v2518 = vpop.f32.mrf.mxu0
      %v2519 = vadd.f32 0.0, %v2518
      %2520 = vmatmul.f32.gmra.mxu0 %v2409
      %v2521 = vpop.f32.mrf.mxu0
      %v2522 = vadd.f32 0.0, %v2521
      %2523 = vmatmul.f32.gmra.mxu0 %v2412
      %v2524 = vpop.f32.mrf.mxu0
      %v2525 = vadd.f32 0.0, %v2524
      %2526 = vmatmul.f32.gmra.mxu0 %v2415
      %v2527 = vpop.f32.mrf.mxu0
      %v2528 = vadd.f32 0.0, %v2527
      %2529 = vmatmul.f32.gmra.mxu0 %v2418
      %v2530 = vpop.f32.mrf.mxu0
      %v2531 = vadd.f32 0.0, %v2530
      %2532 = vmatmul.f32.gmra.mxu0 %v2421
      %v2533 = vpop.f32.mrf.mxu0
      %v2534 = vadd.f32 0.0, %v2533
      %2535 = vmatmul.f32.gmra.mxu0 %v2424
      %v2536 = vpop.f32.mrf.mxu0
      %v2537 = vadd.f32 0.0, %v2536
      %2538 = vmatmul.f32.gmra.mxu0 %v2427
      %v2539 = vpop.f32.mrf.mxu0
      %v2540 = vadd.f32 0.0, %v2539
      %2541 = vmatmul.f32.gmra.mxu0 %v2430
      %v2542 = vpop.f32.mrf.mxu0
      %v2543 = vadd.f32 0.0, %v2542
      %2544 = vmatmul.f32.gmra.mxu0 %v2433
      %v2545 = vpop.f32.mrf.mxu0
      %v2546 = vadd.f32 0.0, %v2545
      %2547 = vmatmul.f32.gmra.mxu0 %v2436
      %v2548 = vpop.f32.mrf.mxu0
      %v2549 = vadd.f32 0.0, %v2548
      %2550 = vmatmul.f32.gmra.mxu0 %v2439
      %v2551 = vpop.f32.mrf.mxu0
      %v2552 = vadd.f32 0.0, %v2551
      %2553 = vmatmul.f32.gmra.mxu0 %v2442
      %v2554 = vpop.f32.mrf.mxu0
      %v2555 = vadd.f32 0.0, %v2554
      %2556 = vdwg.mxu0
      %2557 = vrot.lane.b32.xlu0 %v670, 4
      %v2558 = vpop.permute.xlu0 %2557
      %2559 = vrot.lane.b32.xlu0 %v675, 4
      %v2560 = vpop.permute.xlu0 %2559
      %2561 = vrot.lane.b32.xlu0 %v680, 4
      %v2562 = vpop.permute.xlu0 %2561
      %2563 = vrot.lane.b32.xlu0 %v685, 4
      %v2564 = vpop.permute.xlu0 %2563
      %2565 = vrot.lane.b32.xlu0 %v690, 4
      %v2566 = vpop.permute.xlu0 %2565
      %2567 = vrot.lane.b32.xlu0 %v695, 4
      %v2568 = vpop.permute.xlu0 %2567
      %2569 = vrot.lane.b32.xlu0 %v700, 4
      %v2570 = vpop.permute.xlu0 %2569
      %2571 = vrot.lane.b32.xlu0 %v705, 4
      %v2572 = vpop.permute.xlu0 %2571
      %2573 = vrot.lane.b32.xlu0 %v710, 4
      %v2574 = vpop.permute.xlu0 %2573
      %2575 = vrot.lane.b32.xlu0 %v715, 4
      %v2576 = vpop.permute.xlu0 %2575
      %2577 = vrot.lane.b32.xlu0 %v720, 4
      %v2578 = vpop.permute.xlu0 %2577
      %2579 = vrot.lane.b32.xlu0 %v725, 4
      %v2580 = vpop.permute.xlu0 %2579
      %2581 = vrot.lane.b32.xlu0 %v730, 4
      %v2582 = vpop.permute.xlu0 %2581
      %2583 = vrot.lane.b32.xlu0 %v735, 4
      %v2584 = vpop.permute.xlu0 %2583
      %2585 = vrot.lane.b32.xlu0 %v740, 4
      %v2586 = vpop.permute.xlu0 %2585
      %2587 = vrot.lane.b32.xlu0 %v745, 4
      %v2588 = vpop.permute.xlu0 %2587
      %2605 = vrot.lane.b32.xlu0 %v1787, 8
      %v2606 = vpop.permute.xlu0 %2605
      %2607 = vrot.lane.b32.xlu0 %v1790, 8
      %v2608 = vpop.permute.xlu0 %2607
      %2609 = vrot.lane.b32.xlu0 %v1793, 8
      %v2610 = vpop.permute.xlu0 %2609
      %2611 = vrot.lane.b32.xlu0 %v1796, 8
      %v2612 = vpop.permute.xlu0 %2611
      %2613 = vrot.lane.b32.xlu0 %v1799, 8
      %v2614 = vpop.permute.xlu0 %2613
      %2615 = vrot.lane.b32.xlu0 %v1802, 8
      %v2616 = vpop.permute.xlu0 %2615
      %2617 = vrot.lane.b32.xlu0 %v1805, 8
      %v2618 = vpop.permute.xlu0 %2617
      %2619 = vrot.lane.b32.xlu0 %v1808, 8
      %v2620 = vpop.permute.xlu0 %2619
      %2621 = vrot.lane.b32.xlu0 %v1811, 8
      %v2622 = vpop.permute.xlu0 %2621
      %2623 = vrot.lane.b32.xlu0 %v1814, 8
      %v2624 = vpop.permute.xlu0 %2623
      %2625 = vrot.lane.b32.xlu0 %v1817, 8
      %v2626 = vpop.permute.xlu0 %2625
      %2627 = vrot.lane.b32.xlu0 %v1820, 8
      %v2628 = vpop.permute.xlu0 %2627
      %2629 = vrot.lane.b32.xlu0 %v1823, 8
      %v2630 = vpop.permute.xlu0 %2629
      %2631 = vrot.lane.b32.xlu0 %v1826, 8
      %v2632 = vpop.permute.xlu0 %2631
      %2633 = vrot.lane.b32.xlu0 %v1829, 8
      %v2634 = vpop.permute.xlu0 %2633
      %2635 = vrot.lane.b32.xlu0 %v1832, 8
      %v2636 = vpop.permute.xlu0 %2635
      %2653 = vrot.lane.b32.xlu0 %v2076, 12
      %v2654 = vpop.permute.xlu0 %2653
      %2655 = vrot.lane.b32.xlu0 %v2081, 12
      %v2656 = vpop.permute.xlu0 %2655
      %2657 = vrot.lane.b32.xlu0 %v2086, 12
      %v2658 = vpop.permute.xlu0 %2657
      %2659 = vrot.lane.b32.xlu0 %v2091, 12
      %v2660 = vpop.permute.xlu0 %2659
      %2661 = vrot.lane.b32.xlu0 %v2096, 12
      %v2662 = vpop.permute.xlu0 %2661
      %2663 = vrot.lane.b32.xlu0 %v2101, 12
      %v2664 = vpop.permute.xlu0 %2663
      %2665 = vrot.lane.b32.xlu0 %v2106, 12
      %v2666 = vpop.permute.xlu0 %2665
      %2667 = vrot.lane.b32.xlu0 %v2111, 12
      %v2668 = vpop.permute.xlu0 %2667
      %2669 = vrot.lane.b32.xlu0 %v2116, 12
      %v2670 = vpop.permute.xlu0 %2669
      %2671 = vrot.lane.b32.xlu0 %v2121, 12
      %v2672 = vpop.permute.xlu0 %2671
      %2673 = vrot.lane.b32.xlu0 %v2126, 12
      %v2674 = vpop.permute.xlu0 %2673
      %2675 = vrot.lane.b32.xlu0 %v2131, 12
      %v2676 = vpop.permute.xlu0 %2675
      %2677 = vrot.lane.b32.xlu0 %v2136, 12
      %v2678 = vpop.permute.xlu0 %2677
      %2679 = vrot.lane.b32.xlu0 %v2141, 12
      %v2680 = vpop.permute.xlu0 %2679
      %2681 = vrot.lane.b32.xlu0 %v2146, 12
      %v2682 = vpop.permute.xlu0 %2681
      %2683 = vrot.lane.b32.xlu0 %v2151, 12
      %v2684 = vpop.permute.xlu0 %2683
      %v2701 = vsel %vm843, %v252, %v2558
      %v2702 = vsel %vm843, %v255, %v2560
      %v2703 = vsel %vm843, %v258, %v2562
      %v2704 = vsel %vm843, %v261, %v2564
      %v2705 = vsel %vm843, %v264, %v2566
      %v2706 = vsel %vm843, %v267, %v2568
      %v2707 = vsel %vm843, %v270, %v2570
      %v2708 = vsel %vm843, %v273, %v2572
      %v2709 = vsel %vm843, %v276, %v2574
      %v2710 = vsel %vm843, %v279, %v2576
      %v2711 = vsel %vm843, %v282, %v2578
      %v2712 = vsel %vm843, %v285, %v2580
      %v2713 = vsel %vm843, %v288, %v2582
      %v2714 = vsel %vm843, %v291, %v2584
      %v2715 = vsel %vm843, %v294, %v2586
      %v2716 = vsel %vm843, %v297, %v2588
      %v2717 = vsel %vm876, %v2701, %v2606
      %v2718 = vsel %vm876, %v2702, %v2608
      %v2719 = vsel %vm876, %v2703, %v2610
      %v2720 = vsel %vm876, %v2704, %v2612
      %v2721 = vsel %vm876, %v2705, %v2614
      %v2722 = vsel %vm876, %v2706, %v2616
      %v2723 = vsel %vm876, %v2707, %v2618
      %v2724 = vsel %vm876, %v2708, %v2620
      %v2725 = vsel %vm876, %v2709, %v2622
      %v2726 = vsel %vm876, %v2710, %v2624
      %v2727 = vsel %vm876, %v2711, %v2626
      %v2728 = vsel %vm876, %v2712, %v2628
      %v2729 = vsel %vm876, %v2713, %v2630
      %v2730 = vsel %vm876, %v2714, %v2632
      %v2731 = vsel %vm876, %v2715, %v2634
      %v2732 = vsel %vm876, %v2716, %v2636
      %v2733 = vsel %vm909, %v2717, %v2654
      %v2734 = vsel %vm909, %v2718, %v2656
      %v2735 = vsel %vm909, %v2719, %v2658
      %v2736 = vsel %vm909, %v2720, %v2660
      %v2737 = vsel %vm909, %v2721, %v2662
      %v2738 = vsel %vm909, %v2722, %v2664
      %v2739 = vsel %vm909, %v2723, %v2666
      %v2740 = vsel %vm909, %v2724, %v2668
      %v2741 = vsel %vm909, %v2725, %v2670
      %v2742 = vsel %vm909, %v2726, %v2672
      %v2743 = vsel %vm909, %v2727, %v2674
      %v2744 = vsel %vm909, %v2728, %v2676
      %v2745 = vsel %vm909, %v2729, %v2678
      %v2746 = vsel %vm909, %v2730, %v2680
      %v2747 = vsel %vm909, %v2731, %v2682
      %v2748 = vsel %vm909, %v2732, %v2684
      %s2749 = scalar_lea.vmem %s1, 48
      %v2750 = vld [vmem:[%s2749] sm:$0xff]
      %v2751 = vld [vmem:[%s2749 + $0x8] sm:$0xff]
      %v2768 = vrot.slane %v2313, 1
      %v2769 = vrot.slane %v2314, 1
      %v2770 = vsel %vm346, %v2768, %v2769
      %v2771 = vrot.slane %v2733, 1
      %v2772 = vsel %vm346, %v2769, %v2771
      %v2773 = vrot.slane %v2315, 1
      %v2774 = vrot.slane %v2316, 1
      %v2775 = vsel %vm346, %v2773, %v2774
      %v2776 = vrot.slane %v2734, 1
      %v2777 = vsel %vm346, %v2774, %v2776
      %v2778 = vrot.slane %v2317, 1
      %v2779 = vrot.slane %v2318, 1
      %v2780 = vsel %vm346, %v2778, %v2779
      %v2781 = vrot.slane %v2735, 1
      %v2782 = vsel %vm346, %v2779, %v2781
      %v2783 = vrot.slane %v2319, 1
      %v2784 = vrot.slane %v2320, 1
      %v2785 = vsel %vm346, %v2783, %v2784
      %v2786 = vrot.slane %v2736, 1
      %v2787 = vsel %vm346, %v2784, %v2786
      %v2788 = vrot.slane %v2321, 1
      %v2789 = vrot.slane %v2322, 1
      %v2790 = vsel %vm346, %v2788, %v2789
      %v2791 = vrot.slane %v2737, 1
      %v2792 = vsel %vm346, %v2789, %v2791
      %v2793 = vrot.slane %v2323, 1
      %v2794 = vrot.slane %v2324, 1
      %v2795 = vsel %vm346, %v2793, %v2794
      %v2796 = vrot.slane %v2738, 1
      %v2797 = vsel %vm346, %v2794, %v2796
      %v2798 = vrot.slane %v2325, 1
      %v2799 = vrot.slane %v2326, 1
      %v2800 = vsel %vm346, %v2798, %v2799
      %v2801 = vrot.slane %v2739, 1
      %v2802 = vsel %vm346, %v2799, %v2801
      %v2803 = vrot.slane %v2327, 1
      %v2804 = vrot.slane %v2328, 1
      %v2805 = vsel %vm346, %v2803, %v2804
      %v2806 = vrot.slane %v2740, 1
      %v2807 = vsel %vm346, %v2804, %v2806
      %v2808 = vrot.slane %v2329, 1
      %v2809 = vrot.slane %v2330, 1
      %v2810 = vsel %vm346, %v2808, %v2809
      %v2811 = vrot.slane %v2741, 1
      %v2812 = vsel %vm346, %v2809, %v2811
      %v2813 = vrot.slane %v2331, 1
      %v2814 = vrot.slane %v2332, 1
      %v2815 = vsel %vm346, %v2813, %v2814
      %v2816 = vrot.slane %v2742, 1
      %v2817 = vsel %vm346, %v2814, %v2816
      %v2818 = vrot.slane %v2333, 1
      %v2819 = vrot.slane %v2334, 1
      %v2820 = vsel %vm346, %v2818, %v2819
      %v2821 = vrot.slane %v2743, 1
      %v2822 = vsel %vm346, %v2819, %v2821
      %v2823 = vrot.slane %v2335, 1
      %v2824 = vrot.slane %v2336, 1
      %v2825 = vsel %vm346, %v2823, %v2824
      %v2826 = vrot.slane %v2744, 1
      %v2827 = vsel %vm346, %v2824, %v2826
      %v2828 = vrot.slane %v2337, 1
      %v2829 = vrot.slane %v2338, 1
      %v2830 = vsel %vm346, %v2828, %v2829
      %v2831 = vrot.slane %v2745, 1
      %v2832 = vsel %vm346, %v2829, %v2831
      %v2833 = vrot.slane %v2339, 1
      %v2834 = vrot.slane %v2340, 1
      %v2835 = vsel %vm346, %v2833, %v2834
      %v2836 = vrot.slane %v2746, 1
      %v2837 = vsel %vm346, %v2834, %v2836
      %v2838 = vrot.slane %v2341, 1
      %v2839 = vrot.slane %v2342, 1
      %v2840 = vsel %vm346, %v2838, %v2839
      %v2841 = vrot.slane %v2747, 1
      %v2842 = vsel %vm346, %v2839, %v2841
      %v2843 = vrot.slane %v2343, 1
      %v2844 = vrot.slane %v2344, 1
      %v2845 = vsel %vm346, %v2843, %v2844
      %v2846 = vrot.slane %v2748, 1
      %v2847 = vsel %vm346, %v2844, %v2846
      %v2848 = vsel %vm944, %v2770, 0
      %v2850 = vsel %vm944, %v2772, 0
      %v2852 = vsel %vm944, %v2775, 0
      %v2854 = vsel %vm944, %v2777, 0
      %v2856 = vsel %vm944, %v2780, 0
      %v2858 = vsel %vm944, %v2782, 0
      %v2860 = vsel %vm944, %v2785, 0
      %v2862 = vsel %vm944, %v2787, 0
      %v2864 = vsel %vm944, %v2790, 0
      %v2866 = vsel %vm944, %v2792, 0
      %v2868 = vsel %vm944, %v2795, 0
      %v2870 = vsel %vm944, %v2797, 0
      %v2872 = vsel %vm944, %v2800, 0
      %v2874 = vsel %vm944, %v2802, 0
      %v2876 = vsel %vm944, %v2805, 0
      %v2878 = vsel %vm944, %v2807, 0
      %v2880 = vsel %vm944, %v2810, 0
      %v2882 = vsel %vm944, %v2812, 0
      %v2884 = vsel %vm944, %v2815, 0
      %v2886 = vsel %vm944, %v2817, 0
      %v2888 = vsel %vm944, %v2820, 0
      %v2890 = vsel %vm944, %v2822, 0
      %v2892 = vsel %vm944, %v2825, 0
      %v2894 = vsel %vm944, %v2827, 0
      %v2896 = vsel %vm944, %v2830, 0
      %v2898 = vsel %vm944, %v2832, 0
      %v2900 = vsel %vm944, %v2835, 0
      %v2902 = vsel %vm944, %v2837, 0
      %v2904 = vsel %vm944, %v2840, 0
      %v2906 = vsel %vm944, %v2842, 0
      %v2908 = vsel %vm944, %v2845, 0
      %v2910 = vsel %vm944, %v2847, 0
      %2912 = vmatpush.msra.mxu0 0.0
      %2913 = vmatpush.msra.mxu0 0.0
      %2914 = vmatpush.msra.mxu0 0.0
      %2915 = vmatpush.msra.mxu0 0.0
      %2916 = vmatpush.msra.mxu0 0.0
      %2917 = vmatpush.msra.mxu0 0.0
      %2918 = vmatpush.msra.mxu0 0.0
      %2919 = vmatpush.msra.mxu0 0.0
      %2920 = vmatpush.msra.mxu0 0.0
      %2921 = vmatpush.msra.mxu0 0.0
      %2922 = vmatpush.msra.mxu0 0.0
      %2923 = vmatpush.msra.mxu0 0.0
      %2924 = vmatpush.msra.mxu0 0.0
      %2925 = vmatpush.msra.mxu0 0.0
      %2926 = vmatpush.msra.mxu0 %v2751
      %2927 = vmatpush.msra.mxu0 %v2750
      %2928 = vmatmul.f32.gmra.mxu0 %v2848
      %v2929 = vpop.f32.mrf.mxu0
      %v2930 = vadd.f32 0.0, %v2929
      %2931 = vmatmul.f32.gmra.mxu0 %v2850
      %v2932 = vpop.f32.mrf.mxu0
      %v2933 = vadd.f32 0.0, %v2932
      %2934 = vmatmul.f32.gmra.mxu0 %v2852
      %v2935 = vpop.f32.mrf.mxu0
      %v2936 = vadd.f32 0.0, %v2935
      %2937 = vmatmul.f32.gmra.mxu0 %v2854
      %v2938 = vpop.f32.mrf.mxu0
      %v2939 = vadd.f32 0.0, %v2938
      %2940 = vmatmul.f32.gmra.mxu0 %v2856
      %v2941 = vpop.f32.mrf.mxu0
      %v2942 = vadd.f32 0.0, %v2941
      %2943 = vmatmul.f32.gmra.mxu0 %v2858
      %v2944 = vpop.f32.mrf.mxu0
      %v2945 = vadd.f32 0.0, %v2944
      %2946 = vmatmul.f32.gmra.mxu0 %v2860
      %v2947 = vpop.f32.mrf.mxu0
      %v2948 = vadd.f32 0.0, %v2947
      %2949 = vmatmul.f32.gmra.mxu0 %v2862
      %v2950 = vpop.f32.mrf.mxu0
      %v2951 = vadd.f32 0.0, %v2950
      %2952 = vmatmul.f32.gmra.mxu0 %v2864
      %v2953 = vpop.f32.mrf.mxu0
      %v2954 = vadd.f32 0.0, %v2953
      %2955 = vmatmul.f32.gmra.mxu0 %v2866
      %v2956 = vpop.f32.mrf.mxu0
      %v2957 = vadd.f32 0.0, %v2956
      %2958 = vmatmul.f32.gmra.mxu0 %v2868
      %v2959 = vpop.f32.mrf.mxu0
      %v2960 = vadd.f32 0.0, %v2959
      %2961 = vmatmul.f32.gmra.mxu0 %v2870
      %v2962 = vpop.f32.mrf.mxu0
      %v2963 = vadd.f32 0.0, %v2962
      %2964 = vmatmul.f32.gmra.mxu0 %v2872
      %v2965 = vpop.f32.mrf.mxu0
      %v2966 = vadd.f32 0.0, %v2965
      %2967 = vmatmul.f32.gmra.mxu0 %v2874
      %v2968 = vpop.f32.mrf.mxu0
      %v2969 = vadd.f32 0.0, %v2968
      %2970 = vmatmul.f32.gmra.mxu0 %v2876
      %v2971 = vpop.f32.mrf.mxu0
      %v2972 = vadd.f32 0.0, %v2971
      %2973 = vmatmul.f32.gmra.mxu0 %v2878
      %v2974 = vpop.f32.mrf.mxu0
      %v2975 = vadd.f32 0.0, %v2974
      %2976 = vmatmul.f32.gmra.mxu0 %v2880
      %v2977 = vpop.f32.mrf.mxu0
      %v2978 = vadd.f32 0.0, %v2977
      %2979 = vmatmul.f32.gmra.mxu0 %v2882
      %v2980 = vpop.f32.mrf.mxu0
      %v2981 = vadd.f32 0.0, %v2980
      %2982 = vmatmul.f32.gmra.mxu0 %v2884
      %v2983 = vpop.f32.mrf.mxu0
      %v2984 = vadd.f32 0.0, %v2983
      %2985 = vmatmul.f32.gmra.mxu0 %v2886
      %v2986 = vpop.f32.mrf.mxu0
      %v2987 = vadd.f32 0.0, %v2986
      %2988 = vmatmul.f32.gmra.mxu0 %v2888
      %v2989 = vpop.f32.mrf.mxu0
      %v2990 = vadd.f32 0.0, %v2989
      %2991 = vmatmul.f32.gmra.mxu0 %v2890
      %v2992 = vpop.f32.mrf.mxu0
      %v2993 = vadd.f32 0.0, %v2992
      %2994 = vmatmul.f32.gmra.mxu0 %v2892
      %v2995 = vpop.f32.mrf.mxu0
      %v2996 = vadd.f32 0.0, %v2995
      %2997 = vmatmul.f32.gmra.mxu0 %v2894
      %v2998 = vpop.f32.mrf.mxu0
      %v2999 = vadd.f32 0.0, %v2998
      %3000 = vmatmul.f32.gmra.mxu0 %v2896
      %v3001 = vpop.f32.mrf.mxu0
      %v3002 = vadd.f32 0.0, %v3001
      %3003 = vmatmul.f32.gmra.mxu0 %v2898
      %v3004 = vpop.f32.mrf.mxu0
      %v3005 = vadd.f32 0.0, %v3004
      %3006 = vmatmul.f32.gmra.mxu0 %v2900
      %v3007 = vpop.f32.mrf.mxu0
      %v3008 = vadd.f32 0.0, %v3007
      %3009 = vmatmul.f32.gmra.mxu0 %v2902
      %v3010 = vpop.f32.mrf.mxu0
      %v3011 = vadd.f32 0.0, %v3010
      %3012 = vmatmul.f32.gmra.mxu0 %v2904
      %v3013 = vpop.f32.mrf.mxu0
      %v3014 = vadd.f32 0.0, %v3013
      %3015 = vmatmul.f32.gmra.mxu0 %v2906
      %v3016 = vpop.f32.mrf.mxu0
      %v3017 = vadd.f32 0.0, %v3016
      %3018 = vmatmul.f32.gmra.mxu0 %v2908
      %v3019 = vpop.f32.mrf.mxu0
      %v3020 = vadd.f32 0.0, %v3019
      %3021 = vmatmul.f32.gmra.mxu0 %v2910
      %v3022 = vpop.f32.mrf.mxu0
      %v3023 = vadd.f32 0.0, %v3022
      %3024 = vdwg.mxu0
      %3057 = vrot.lane.b32.xlu0 %v2930, 4
      %v3058 = vpop.permute.xlu0 %3057
      %3059 = vrot.lane.b32.xlu0 %v2933, 4
      %v3060 = vpop.permute.xlu0 %3059
      %3061 = vrot.lane.b32.xlu0 %v2936, 4
      %v3062 = vpop.permute.xlu0 %3061
      %3063 = vrot.lane.b32.xlu0 %v2939, 4
      %v3064 = vpop.permute.xlu0 %3063
      %3065 = vrot.lane.b32.xlu0 %v2942, 4
      %v3066 = vpop.permute.xlu0 %3065
      %3067 = vrot.lane.b32.xlu0 %v2945, 4
      %v3068 = vpop.permute.xlu0 %3067
      %3069 = vrot.lane.b32.xlu0 %v2948, 4
      %v3070 = vpop.permute.xlu0 %3069
      %3071 = vrot.lane.b32.xlu0 %v2951, 4
      %v3072 = vpop.permute.xlu0 %3071
      %3073 = vrot.lane.b32.xlu0 %v2954, 4
      %v3074 = vpop.permute.xlu0 %3073
      %3075 = vrot.lane.b32.xlu0 %v2957, 4
      %v3076 = vpop.permute.xlu0 %3075
      %3077 = vrot.lane.b32.xlu0 %v2960, 4
      %v3078 = vpop.permute.xlu0 %3077
      %3079 = vrot.lane.b32.xlu0 %v2963, 4
      %v3080 = vpop.permute.xlu0 %3079
      %3081 = vrot.lane.b32.xlu0 %v2966, 4
      %v3082 = vpop.permute.xlu0 %3081
      %3083 = vrot.lane.b32.xlu0 %v2969, 4
      %v3084 = vpop.permute.xlu0 %3083
      %3085 = vrot.lane.b32.xlu0 %v2972, 4
      %v3086 = vpop.permute.xlu0 %3085
      %3087 = vrot.lane.b32.xlu0 %v2975, 4
      %v3088 = vpop.permute.xlu0 %3087
      %3089 = vrot.lane.b32.xlu0 %v2978, 4
      %v3090 = vpop.permute.xlu0 %3089
      %3091 = vrot.lane.b32.xlu0 %v2981, 4
      %v3092 = vpop.permute.xlu0 %3091
      %3093 = vrot.lane.b32.xlu0 %v2984, 4
      %v3094 = vpop.permute.xlu0 %3093
      %3095 = vrot.lane.b32.xlu0 %v2987, 4
      %v3096 = vpop.permute.xlu0 %3095
      %3097 = vrot.lane.b32.xlu0 %v2990, 4
      %v3098 = vpop.permute.xlu0 %3097
      %3099 = vrot.lane.b32.xlu0 %v2993, 4
      %v3100 = vpop.permute.xlu0 %3099
      %3101 = vrot.lane.b32.xlu0 %v2996, 4
      %v3102 = vpop.permute.xlu0 %3101
      %3103 = vrot.lane.b32.xlu0 %v2999, 4
      %v3104 = vpop.permute.xlu0 %3103
      %3105 = vrot.lane.b32.xlu0 %v3002, 4
      %v3106 = vpop.permute.xlu0 %3105
      %3107 = vrot.lane.b32.xlu0 %v3005, 4
      %v3108 = vpop.permute.xlu0 %3107
      %3109 = vrot.lane.b32.xlu0 %v3008, 4
      %v3110 = vpop.permute.xlu0 %3109
      %3111 = vrot.lane.b32.xlu0 %v3011, 4
      %v3112 = vpop.permute.xlu0 %3111
      %3113 = vrot.lane.b32.xlu0 %v3014, 4
      %v3114 = vpop.permute.xlu0 %3113
      %3115 = vrot.lane.b32.xlu0 %v3017, 4
      %v3116 = vpop.permute.xlu0 %3115
      %3117 = vrot.lane.b32.xlu0 %v3020, 4
      %v3118 = vpop.permute.xlu0 %3117
      %3119 = vrot.lane.b32.xlu0 %v3023, 4
      %v3120 = vpop.permute.xlu0 %3119
      %v3153 = vsel %vm843, %v2462, %v3058
      %v3154 = vsel %vm843, %v2465, %v3060
      %v3155 = vsel %vm843, %v2468, %v3062
      %v3156 = vsel %vm843, %v2471, %v3064
      %v3157 = vsel %vm843, %v2474, %v3066
      %v3158 = vsel %vm843, %v2477, %v3068
      %v3159 = vsel %vm843, %v2480, %v3070
      %v3160 = vsel %vm843, %v2483, %v3072
      %v3161 = vsel %vm843, %v2486, %v3074
      %v3162 = vsel %vm843, %v2489, %v3076
      %v3163 = vsel %vm843, %v2492, %v3078
      %v3164 = vsel %vm843, %v2495, %v3080
      %v3165 = vsel %vm843, %v2498, %v3082
      %v3166 = vsel %vm843, %v2501, %v3084
      %v3167 = vsel %vm843, %v2504, %v3086
      %v3168 = vsel %vm843, %v2507, %v3088
      %v3169 = vsel %vm843, %v2510, %v3090
      %v3170 = vsel %vm843, %v2513, %v3092
      %v3171 = vsel %vm843, %v2516, %v3094
      %v3172 = vsel %vm843, %v2519, %v3096
      %v3173 = vsel %vm843, %v2522, %v3098
      %v3174 = vsel %vm843, %v2525, %v3100
      %v3175 = vsel %vm843, %v2528, %v3102
      %v3176 = vsel %vm843, %v2531, %v3104
      %v3177 = vsel %vm843, %v2534, %v3106
      %v3178 = vsel %vm843, %v2537, %v3108
      %v3179 = vsel %vm843, %v2540, %v3110
      %v3180 = vsel %vm843, %v2543, %v3112
      %v3181 = vsel %vm843, %v2546, %v3114
      %v3182 = vsel %vm843, %v2549, %v3116
      %v3183 = vsel %vm843, %v2552, %v3118
      %v3184 = vsel %vm843, %v2555, %v3120
      %v3185 = vld [vmem:[%s2] sm:$0x1]
      %v3187 = vperm.slane %v3185, 0
      %v3189 = vadd.f32 %v1750, %v3187
      %v3190 = vadd.f32 %v1751, %v3187
      %v3191 = vadd.f32 %v3153, %v3187
      %v3192 = vadd.f32 %v3154, %v3187
      %v3193 = vadd.f32 %v1752, %v3187
      %v3194 = vadd.f32 %v1753, %v3187
      %v3195 = vadd.f32 %v3155, %v3187
      %v3196 = vadd.f32 %v3156, %v3187
      %v3197 = vadd.f32 %v1754, %v3187
      %v3198 = vadd.f32 %v1755, %v3187
      %v3199 = vadd.f32 %v3157, %v3187
      %v3200 = vadd.f32 %v3158, %v3187
      %v3201 = vadd.f32 %v1756, %v3187
      %v3202 = vadd.f32 %v1757, %v3187
      %v3203 = vadd.f32 %v3159, %v3187
      %v3204 = vadd.f32 %v3160, %v3187
      %v3205 = vadd.f32 %v1758, %v3187
      %v3206 = vadd.f32 %v1759, %v3187
      %v3207 = vadd.f32 %v3161, %v3187
      %v3208 = vadd.f32 %v3162, %v3187
      %v3209 = vadd.f32 %v1760, %v3187
      %v3210 = vadd.f32 %v1761, %v3187
      %v3211 = vadd.f32 %v3163, %v3187
      %v3212 = vadd.f32 %v3164, %v3187
      %v3213 = vadd.f32 %v1762, %v3187
      %v3214 = vadd.f32 %v1763, %v3187
      %v3215 = vadd.f32 %v3165, %v3187
      %v3216 = vadd.f32 %v3166, %v3187
      %v3217 = vadd.f32 %v1764, %v3187
      %v3218 = vadd.f32 %v1765, %v3187
      %v3219 = vadd.f32 %v3167, %v3187
      %v3220 = vadd.f32 %v3168, %v3187
      %v3221 = vadd.f32 %v1766, %v3187
      %v3222 = vadd.f32 %v1767, %v3187
      %v3223 = vadd.f32 %v3169, %v3187
      %v3224 = vadd.f32 %v3170, %v3187
      %v3225 = vadd.f32 %v1768, %v3187
      %v3226 = vadd.f32 %v1769, %v3187
      %v3227 = vadd.f32 %v3171, %v3187
      %v3228 = vadd.f32 %v3172, %v3187
      %v3229 = vadd.f32 %v1770, %v3187
      %v3230 = vadd.f32 %v1771, %v3187
      %v3231 = vadd.f32 %v3173, %v3187
      %v3232 = vadd.f32 %v3174, %v3187
      %v3233 = vadd.f32 %v1772, %v3187
      %v3234 = vadd.f32 %v1773, %v3187
      %v3235 = vadd.f32 %v3175, %v3187
      %v3236 = vadd.f32 %v3176, %v3187
      %v3237 = vadd.f32 %v1774, %v3187
      %v3238 = vadd.f32 %v1775, %v3187
      %v3239 = vadd.f32 %v3177, %v3187
      %v3240 = vadd.f32 %v3178, %v3187
      %v3241 = vadd.f32 %v1776, %v3187
      %v3242 = vadd.f32 %v1777, %v3187
      %v3243 = vadd.f32 %v3179, %v3187
      %v3244 = vadd.f32 %v3180, %v3187
      %v3245 = vadd.f32 %v1778, %v3187
      %v3246 = vadd.f32 %v1779, %v3187
      %v3247 = vadd.f32 %v3181, %v3187
      %v3248 = vadd.f32 %v3182, %v3187
      %v3249 = vadd.f32 %v1780, %v3187
      %v3250 = vadd.f32 %v1781, %v3187
      %v3251 = vadd.f32 %v3183, %v3187
      %v3252 = vadd.f32 %v3184, %v3187
      %3253 = vst.msk [vmem:[%s194] sm:$0xff] %vm876, %v3189
      %3254 = vst.msk [vmem:[%s194 + $0x8] sm:$0xff] %vm876, %v3190
      %3255 = vst.msk [vmem:[%s194 + $0x10] sm:$0xff] %vm876, %v3191
      %3256 = vst.msk [vmem:[%s194 + $0x18] sm:$0xff] %vm876, %v3192
      %3257 = vst.msk [vmem:[%s194 + $0x20] sm:$0xff] %vm876, %v3193
      %3258 = vst.msk [vmem:[%s194 + $0x28] sm:$0xff] %vm876, %v3194
      %3259 = vst.msk [vmem:[%s194 + $0x30] sm:$0xff] %vm876, %v3195
      %3260 = vst.msk [vmem:[%s194 + $0x38] sm:$0xff] %vm876, %v3196
      %3261 = vst.msk [vmem:[%s194 + $0x40] sm:$0xff] %vm876, %v3197
      %3262 = vst.msk [vmem:[%s194 + $0x48] sm:$0xff] %vm876, %v3198
      %3263 = vst.msk [vmem:[%s194 + $0x50] sm:$0xff] %vm876, %v3199
      %3264 = vst.msk [vmem:[%s194 + $0x58] sm:$0xff] %vm876, %v3200
      %3265 = vst.msk [vmem:[%s194 + $0x60] sm:$0xff] %vm876, %v3201
      %3266 = vst.msk [vmem:[%s194 + $0x68] sm:$0xff] %vm876, %v3202
      %3267 = vst.msk [vmem:[%s194 + $0x70] sm:$0xff] %vm876, %v3203
      %3268 = vst.msk [vmem:[%s194 + $0x78] sm:$0xff] %vm876, %v3204
      %3269 = vst.msk [vmem:[%s194 + $0x80] sm:$0xff] %vm876, %v3205
      %3270 = vst.msk [vmem:[%s194 + $0x88] sm:$0xff] %vm876, %v3206
      %3271 = vst.msk [vmem:[%s194 + $0x90] sm:$0xff] %vm876, %v3207
      %3272 = vst.msk [vmem:[%s194 + $0x98] sm:$0xff] %vm876, %v3208
      %3273 = vst.msk [vmem:[%s194 + $0xa0] sm:$0xff] %vm876, %v3209
      %3274 = vst.msk [vmem:[%s194 + $0xa8] sm:$0xff] %vm876, %v3210
      %3275 = vst.msk [vmem:[%s194 + $0xb0] sm:$0xff] %vm876, %v3211
      %3276 = vst.msk [vmem:[%s194 + $0xb8] sm:$0xff] %vm876, %v3212
      %3277 = vst.msk [vmem:[%s194 + $0xc0] sm:$0xff] %vm876, %v3213
      %3278 = vst.msk [vmem:[%s194 + $0xc8] sm:$0xff] %vm876, %v3214
      %3279 = vst.msk [vmem:[%s194 + $0xd0] sm:$0xff] %vm876, %v3215
      %3280 = vst.msk [vmem:[%s194 + $0xd8] sm:$0xff] %vm876, %v3216
      %3281 = vst.msk [vmem:[%s194 + $0xe0] sm:$0xff] %vm876, %v3217
      %3282 = vst.msk [vmem:[%s194 + $0xe8] sm:$0xff] %vm876, %v3218
      %3283 = vst.msk [vmem:[%s194 + $0xf0] sm:$0xff] %vm876, %v3219
      %3284 = vst.msk [vmem:[%s194 + $0xf8] sm:$0xff] %vm876, %v3220
      %3285 = vst.msk [vmem:[%s194 + $0x100] sm:$0xff] %vm876, %v3221
      %3286 = vst.msk [vmem:[%s194 + $0x108] sm:$0xff] %vm876, %v3222
      %3287 = vst.msk [vmem:[%s194 + $0x110] sm:$0xff] %vm876, %v3223
      %3288 = vst.msk [vmem:[%s194 + $0x118] sm:$0xff] %vm876, %v3224
      %3289 = vst.msk [vmem:[%s194 + $0x120] sm:$0xff] %vm876, %v3225
      %3290 = vst.msk [vmem:[%s194 + $0x128] sm:$0xff] %vm876, %v3226
      %3291 = vst.msk [vmem:[%s194 + $0x130] sm:$0xff] %vm876, %v3227
      %3292 = vst.msk [vmem:[%s194 + $0x138] sm:$0xff] %vm876, %v3228
      %3293 = vst.msk [vmem:[%s194 + $0x140] sm:$0xff] %vm876, %v3229
      %3294 = vst.msk [vmem:[%s194 + $0x148] sm:$0xff] %vm876, %v3230
      %3295 = vst.msk [vmem:[%s194 + $0x150] sm:$0xff] %vm876, %v3231
      %3296 = vst.msk [vmem:[%s194 + $0x158] sm:$0xff] %vm876, %v3232
      %3297 = vst.msk [vmem:[%s194 + $0x160] sm:$0xff] %vm876, %v3233
      %3298 = vst.msk [vmem:[%s194 + $0x168] sm:$0xff] %vm876, %v3234
      %3299 = vst.msk [vmem:[%s194 + $0x170] sm:$0xff] %vm876, %v3235
      %3300 = vst.msk [vmem:[%s194 + $0x178] sm:$0xff] %vm876, %v3236
      %3301 = vst.msk [vmem:[%s194 + $0x180] sm:$0xff] %vm876, %v3237
      %3302 = vst.msk [vmem:[%s194 + $0x188] sm:$0xff] %vm876, %v3238
      %3303 = vst.msk [vmem:[%s194 + $0x190] sm:$0xff] %vm876, %v3239
      %3304 = vst.msk [vmem:[%s194 + $0x198] sm:$0xff] %vm876, %v3240
      %3305 = vst.msk [vmem:[%s194 + $0x1a0] sm:$0xff] %vm876, %v3241
      %3306 = vst.msk [vmem:[%s194 + $0x1a8] sm:$0xff] %vm876, %v3242
      %3307 = vst.msk [vmem:[%s194 + $0x1b0] sm:$0xff] %vm876, %v3243
      %3308 = vst.msk [vmem:[%s194 + $0x1b8] sm:$0xff] %vm876, %v3244
      %3309 = vst.msk [vmem:[%s194 + $0x1c0] sm:$0xff] %vm876, %v3245
      %3310 = vst.msk [vmem:[%s194 + $0x1c8] sm:$0xff] %vm876, %v3246
      %3311 = vst.msk [vmem:[%s194 + $0x1d0] sm:$0xff] %vm876, %v3247
      %3312 = vst.msk [vmem:[%s194 + $0x1d8] sm:$0xff] %vm876, %v3248
      %3313 = vst.msk [vmem:[%s194 + $0x1e0] sm:$0xff] %vm876, %v3249
      %3314 = vst.msk [vmem:[%s194 + $0x1e8] sm:$0xff] %vm876, %v3250
      %3315 = vst.msk [vmem:[%s194 + $0x1f0] sm:$0xff] %vm876, %v3251
      %3316 = vst.msk [vmem:[%s194 + $0x1f8] sm:$0xff] %vm876, %v3252
      %s3317 = smul.u32 32, %s19
      %p3318 = scmp.lt.s32.totalorder %s18, 1
      %s3319 = scalar_select %p3318, %s18, 1
      %p3320 = scmp.lt.s32.totalorder %s3317, 31
      %s3321 = scalar_select %p3320, %s3317, 31
      %s3322 = smul.addr %s3321, 2
      %s3323 = smul.addr %s3319, 64
      %s3324 = sadd.s32 %s3322, %s3323
      %s3325 = smul.addr %s3324, 8
      %s3326 = scalar_lea.vmem %s3, %s3325
      // Predicated region
      $region33: #{upsample_forward.1} parent=31 // pred_check
        %p3327 = pneg %p114
      $region34: #{upsample_forward.1} parent=31 // pred_check_branch
        %3329 = sbr.rel (%p3327) target = $region36
      $region35: #{upsample_forward.1} parent=31 // pred_region
        %s3330 = smul.u32 32, %s19
      $region36: #{upsample_forward.1} parent=31 // pred_fallthru
        _
    $region32: #{upsample_forward.1} parent=5 // pred_fallthru
      _
    %p3331 = scmp.le.s32.totalorder 2, %s9
    // Predicated region
    $region37: #{upsample_forward.1} parent=5 // pred_check
      %p3332 = pneg %p3331
    $region38: #{upsample_forward.1} parent=5 // pred_check_branch
      %3334 = sbr.rel (%p3332) target = $region40
    $region39: #{upsample_forward.1} parent=5 // pred_region
      %s3335 = ssub.s32 %s9, 2
      // Predicated region
      $region41: #{upsample_forward.1} parent=39 // pred_check
        %p3336 = pneg %p120
      $region42: #{upsample_forward.1} parent=39 // pred_check_branch
        %3338 = sbr.rel (%p3336) target = $region44
      $region43: #{upsample_forward.1} parent=39 // pred_region
        %s3339 = smul.u32 32, %s21
        %p3340 = scmp.lt.s32.totalorder %s20, 1
        %s3341 = scalar_select %p3340, %s20, 1
        %p3342 = scmp.lt.s32.totalorder %s3339, 31
        %s3343 = scalar_select %p3342, %s3339, 31
        %s3344 = smul.addr %s3343, 2
        %s3345 = smul.addr %s3341, 64
        %s3346 = sadd.s32 %s3344, %s3345
        %s3347 = smul.addr %s3346, 8
        %s3348 = scalar_lea.vmem %s3, %s3347
      $region44: #{upsample_forward.1} parent=39 // pred_fallthru
        _
    $region40: #{upsample_forward.1} parent=5 // pred_fallthru
      _
  $region6: #{upsample_forward.1} parent=0 // loop_footer
    %s13 = sadd.s32 1, %s9
  $region7: #{upsample_forward.1} parent=0 // loop_footer_branch
    %8 = sbr.rel target = $region3
  $region8: #{upsample_forward.1} parent=0 // loop_exit
    _

</llo_original>
